<compile_context>
chip_gen: v5e
topology: v5e:2x2
jax: 0.10.0
libtpu: 0.0.40
codegen_flags: <defaults>
</compile_context>

<pallas_src>
import math
from functools import partial

import jax
import jax.numpy as jnp
from jax import lax
from jax.experimental import pallas as pl
from jax.experimental.pallas import tpu as pltpu


CFG = dict(
    vocab_size=100,
    hidden=32,
    heads=4,
    layers=2,
    intermediate=64,
    max_pos=16,
    type_vocab=2,
    n_classes=3,
)

LN_EPS = 1e-12


# ----------------------------- fused encoder kernel -----------------------------

def _layernorm(x, g, b, eps):
    # f32 statistics
    mean = jnp.mean(x, axis=-1, keepdims=True)
    var = jnp.mean(jnp.square(x - mean), axis=-1, keepdims=True)
    return (x - mean) * lax.rsqrt(var + eps) * g + b


def _mm(x_f32, w_bf16):
    # bf16 MXU operands, f32 accumulation.
    return lax.dot_general(
        x_f32.astype(jnp.bfloat16), w_bf16,
        dimension_numbers=(((1,), (0,)), ((), ())),
        preferred_element_type=jnp.float32)


def _encoder_kernel(emb_ref, mask_ref,
                    emb_g_ref, emb_b_ref,
                    wqkv_ref, bqkv_ref, wo_ref, bo_ref,
                    ln1_g_ref, ln1_b_ref,
                    wi_ref, bi_ref, wf_ref, bf_ref,
                    ln2_g_ref, ln2_b_ref,
                    pool_w_ref, pool_b_ref, cls_w_ref, cls_b_ref,
                    out_ref,
                    *, num_layers, num_heads, head_dim, eps):
    H = num_heads * head_dim
    scale = 1.0 / math.sqrt(head_dim)

    x = emb_ref[0].astype(jnp.float32)            # (S, H)  — one batch element per grid step
    add_mask = mask_ref[0].astype(jnp.float32)    # (1, S)  additive (-10000 where masked)

    # embedding layernorm (embedding dropout: identity in eval mode)
    x = _layernorm(x, emb_g_ref[...], emb_b_ref[...], eps)

    for l in range(num_layers):                   # static unroll; weights stacked on axis 0
        # ---- fused QKV projection: (S, H) @ (H, 3H) ----
        qkv = _mm(x, wqkv_ref[l]) + bqkv_ref[l]   # (S, 3H) f32

        # ---- attention over all heads, fully VMEM/vreg resident ----
        ctx_heads = []
        for h in range(num_heads):
            lo = h * head_dim
            q_h = qkv[:, lo:lo + head_dim].astype(jnp.bfloat16)                  # (S, dh)
            k_h = qkv[:, H + lo:H + lo + head_dim].astype(jnp.bfloat16)          # (S, dh)
            v_h = qkv[:, 2 * H + lo:2 * H + lo + head_dim].astype(jnp.bfloat16)  # (S, dh)

            # q @ k^T without explicit transpose (contract last dims of both)
            s = lax.dot_general(q_h, k_h, (((1,), (1,)), ((), ())),
                                preferred_element_type=jnp.float32)
            s = s * scale + add_mask                                             # (S, S)
            s = s - jnp.max(s, axis=-1, keepdims=True)                           # f32 softmax
            p = jnp.exp(s)
            denom = jnp.sum(p, axis=-1, keepdims=True)
            p = p * pl.reciprocal(denom, approx=True)
            o = lax.dot_general(p.astype(jnp.bfloat16), v_h,
                                (((1,), (0,)), ((), ())),
                                preferred_element_type=jnp.float32)              # (S, dh)
            ctx_heads.append(o)
        ctx = jnp.concatenate(ctx_heads, axis=-1)                                # (S, H)

        # ---- output projection + fused residual + layernorm ----
        attn_out = _mm(ctx, wo_ref[l]) + bo_ref[l]
        x = _layernorm(attn_out + x, ln1_g_ref[l], ln1_b_ref[l], eps)

        # ---- FFN (exact erf GELU, matching BERT) + fused residual + layernorm ----
        inter = _mm(x, wi_ref[l]) + bi_ref[l]                                    # (S, I)
        inter = 0.5 * inter * (1.0 + lax.erf(inter * (1.0 / math.sqrt(2.0))))
        ffn = _mm(inter, wf_ref[l]) + bf_ref[l]
        x = _layernorm(ffn + x, ln2_g_ref[l], ln2_b_ref[l], eps)

    # ---- pooler (CLS token) -> dropout (identity in eval) -> classifier, in-kernel ----
    cls_tok = x[0:1, :]                                                          # (1, H)
    pooled = jnp.tanh(_mm(cls_tok, pool_w_ref[...]) + pool_b_ref[...])
    # TODO(synk): training-mode dropout (p=0.3) would use pltpu.prng_seed / prng_random_bits
    logits = _mm(pooled, cls_w_ref[...]) + cls_b_ref[...]                        # (1, C)
    out_ref[0] = logits.astype(out_ref.dtype)


# ----------------------------- parameters -----------------------------

def init_params(key, cfg):
    H, I, L, C = cfg["hidden"], cfg["intermediate"], cfg["layers"], cfg["n_classes"]
    std = 0.02
    ks = iter(jax.random.split(key, 16))

    def w(shape, dtype=jnp.float32):
        return (jax.random.normal(next(ks), shape, jnp.float32) * std).astype(dtype)

    # Matmul weights stored in bf16 (MXU-native on v5e/v6e/v7x); biases / LN params in f32.
    # Per-layer weights stacked on a leading L axis so the fused kernel indexes them in-VMEM.
    return {
        "word_emb": w((cfg["vocab_size"], H)),
        "pos_emb": w((cfg["max_pos"], H)),
        "type_emb": w((cfg["type_vocab"], H)),
        "emb_ln_g": jnp.ones((1, H), jnp.float32),
        "emb_ln_b": jnp.zeros((1, H), jnp.float32),
        "wqkv": w((L, H, 3 * H), jnp.bfloat16),   # [Wq | Wk | Wv] fused along output dim
        "bqkv": jnp.zeros((L, 1, 3 * H), jnp.float32),
        "wo": w((L, H, H), jnp.bfloat16),
        "bo": jnp.zeros((L, 1, H), jnp.float32),
        "ln1_g": jnp.ones((L, 1, H), jnp.float32),
        "ln1_b": jnp.zeros((L, 1, H), jnp.float32),
        "wi": w((L, H, I), jnp.bfloat16),
        "bi": jnp.zeros((L, 1, I), jnp.float32),
        "wf": w((L, I, H), jnp.bfloat16),
        "bf": jnp.zeros((L, 1, H), jnp.float32),
        "ln2_g": jnp.ones((L, 1, H), jnp.float32),
        "ln2_b": jnp.zeros((L, 1, H), jnp.float32),
        "pool_w": w((H, H), jnp.bfloat16),
        "pool_b": jnp.zeros((1, H), jnp.float32),
        "cls_w": w((H, C), jnp.bfloat16),
        "cls_b": jnp.zeros((1, C), jnp.float32),
    }


# ----------------------------- forward pass -----------------------------

def sentiment_classifier_forward(params, input_ids, attention_mask, cfg):
    B, S = input_ids.shape
    H, nh, L = cfg["hidden"], cfg["heads"], cfg["layers"]
    dh = H // nh
    I, C = cfg["intermediate"], cfg["n_classes"]

    # Embedding gathers are glue (data-dependent lookup); everything after is one fused kernel.
    emb = (jnp.take(params["word_emb"], input_ids, axis=0)
           + params["pos_emb"][None, :S, :]
           + params["type_emb"][0][None, None, :])                  # (B, S, H); token_type_ids=0

    add_mask = ((1.0 - attention_mask.astype(jnp.float32)) * -10000.0)[:, None, :]  # (B, 1, S)

    def full(shape):
        return pl.BlockSpec(shape, lambda b, _s=len(shape): (0,) * _s)

    kernel = partial(_encoder_kernel, num_layers=L, num_heads=nh, head_dim=dh, eps=LN_EPS)

    out = pl.pallas_call(
        kernel,
        out_shape=jax.ShapeDtypeStruct((B, 1, C), jnp.float32),
        grid=(B,),
        in_specs=[
            pl.BlockSpec((1, S, H), lambda b: (b, 0, 0)),            # embeddings (per batch)
            pl.BlockSpec((1, 1, S), lambda b: (b, 0, 0)),            # additive mask (per batch)
            full((1, H)), full((1, H)),                              # embedding LN
            full((L, H, 3 * H)), full((L, 1, 3 * H)),                # fused QKV
            full((L, H, H)), full((L, 1, H)),                        # attention output proj
            full((L, 1, H)), full((L, 1, H)),                        # LN1
            full((L, H, I)), full((L, 1, I)),                        # FFN in
            full((L, I, H)), full((L, 1, H)),                        # FFN out
            full((L, 1, H)), full((L, 1, H)),                        # LN2
            full((H, H)), full((1, H)),                              # pooler
            full((H, C)), full((1, C)),                              # classifier
        ],
        out_specs=pl.BlockSpec((1, 1, C), lambda b: (b, 0, 0)),
        compiler_params=pltpu.CompilerParams(
            dimension_semantics=("parallel",)),                      # v7x: batch over 2 TCs
    )(
        emb, add_mask,
        params["emb_ln_g"], params["emb_ln_b"],
        params["wqkv"], params["bqkv"], params["wo"], params["bo"],
        params["ln1_g"], params["ln1_b"],
        params["wi"], params["bi"], params["wf"], params["bf"],
        params["ln2_g"], params["ln2_b"],
        params["pool_w"], params["pool_b"], params["cls_w"], params["cls_b"],
    )
    return out.reshape(B, C)


# ----------------------------- main -----------------------------

if __name__ == "__main__":
    key = jax.random.PRNGKey(0)
    k_params, k_ids = jax.random.split(key)

    B, S = 2, 8
    params = init_params(k_params, CFG)

    input_ids = jax.random.randint(k_ids, (B, S), 0, CFG["vocab_size"], dtype=jnp.int32)
    # second example padded after 5 tokens
    attention_mask = jnp.array([[1, 1, 1, 1, 1, 1, 1, 1],
                                [1, 1, 1, 1, 1, 0, 0, 0]], dtype=jnp.int32)

    fwd = jax.jit(partial(sentiment_classifier_forward, cfg=CFG))
    logits = fwd(params, input_ids, attention_mask)
    jax.block_until_ready(logits)
    assert logits.shape == (B, CFG["n_classes"])
    print("KERNEL_OK")
</pallas_src>

<mosaic_0001>
module attributes {stable_mosaic.version = 11 : i64} {
  func.func @_encoder_kernel(%arg0: i32, %arg1: memref<1x8x32xf32, #tpu.memory_space<vmem>>, %arg2: memref<1x1x8xf32, #tpu.memory_space<vmem>>, %arg3: memref<1x32xf32, #tpu.memory_space<vmem>>, %arg4: memref<1x32xf32, #tpu.memory_space<vmem>>, %arg5: memref<2x32x96xbf16, #tpu.memory_space<vmem>>, %arg6: memref<2x1x96xf32, #tpu.memory_space<vmem>>, %arg7: memref<2x32x32xbf16, #tpu.memory_space<vmem>>, %arg8: memref<2x1x32xf32, #tpu.memory_space<vmem>>, %arg9: memref<2x1x32xf32, #tpu.memory_space<vmem>>, %arg10: memref<2x1x32xf32, #tpu.memory_space<vmem>>, %arg11: memref<2x32x64xbf16, #tpu.memory_space<vmem>>, %arg12: memref<2x1x64xf32, #tpu.memory_space<vmem>>, %arg13: memref<2x64x32xbf16, #tpu.memory_space<vmem>>, %arg14: memref<2x1x32xf32, #tpu.memory_space<vmem>>, %arg15: memref<2x1x32xf32, #tpu.memory_space<vmem>>, %arg16: memref<2x1x32xf32, #tpu.memory_space<vmem>>, %arg17: memref<32x32xbf16, #tpu.memory_space<vmem>>, %arg18: memref<1x32xf32, #tpu.memory_space<vmem>>, %arg19: memref<32x3xbf16, #tpu.memory_space<vmem>>, %arg20: memref<1x3xf32, #tpu.memory_space<vmem>>, %arg21: memref<1x1x3xf32, #tpu.memory_space<vmem>>) attributes {dimension_semantics = [#tpu.dimension_semantics<parallel>], iteration_bounds = array<i64: 2>, scalar_prefetch = 0 : i64, scratch_operands = 0 : i64, tpu.core_type = #tpu.core_type<tc>, window_params = [{transform_indices = @transform_0, window_bounds = array<i64: 1, 8, 32>}, {transform_indices = @transform_1, window_bounds = array<i64: 1, 1, 8>}, {pipeline_mode = #tpu.pipeline_mode<synchronous>, transform_indices = @transform_2, window_bounds = array<i64: 1, 32>}, {pipeline_mode = #tpu.pipeline_mode<synchronous>, transform_indices = @transform_3, window_bounds = array<i64: 1, 32>}, {pipeline_mode = #tpu.pipeline_mode<synchronous>, transform_indices = @transform_4, window_bounds = array<i64: 2, 32, 96>}, {pipeline_mode = #tpu.pipeline_mode<synchronous>, transform_indices = @transform_5, window_bounds = array<i64: 2, 1, 96>}, {pipeline_mode = #tpu.pipeline_mode<synchronous>, transform_indices = @transform_6, window_bounds = array<i64: 2, 32, 32>}, {pipeline_mode = #tpu.pipeline_mode<synchronous>, transform_indices = @transform_7, window_bounds = array<i64: 2, 1, 32>}, {pipeline_mode = #tpu.pipeline_mode<synchronous>, transform_indices = @transform_8, window_bounds = array<i64: 2, 1, 32>}, {pipeline_mode = #tpu.pipeline_mode<synchronous>, transform_indices = @transform_9, window_bounds = array<i64: 2, 1, 32>}, {pipeline_mode = #tpu.pipeline_mode<synchronous>, transform_indices = @transform_10, window_bounds = array<i64: 2, 32, 64>}, {pipeline_mode = #tpu.pipeline_mode<synchronous>, transform_indices = @transform_11, window_bounds = array<i64: 2, 1, 64>}, {pipeline_mode = #tpu.pipeline_mode<synchronous>, transform_indices = @transform_12, window_bounds = array<i64: 2, 64, 32>}, {pipeline_mode = #tpu.pipeline_mode<synchronous>, transform_indices = @transform_13, window_bounds = array<i64: 2, 1, 32>}, {pipeline_mode = #tpu.pipeline_mode<synchronous>, transform_indices = @transform_14, window_bounds = array<i64: 2, 1, 32>}, {pipeline_mode = #tpu.pipeline_mode<synchronous>, transform_indices = @transform_15, window_bounds = array<i64: 2, 1, 32>}, {pipeline_mode = #tpu.pipeline_mode<synchronous>, transform_indices = @transform_16, window_bounds = array<i64: 32, 32>}, {pipeline_mode = #tpu.pipeline_mode<synchronous>, transform_indices = @transform_17, window_bounds = array<i64: 1, 32>}, {pipeline_mode = #tpu.pipeline_mode<synchronous>, transform_indices = @transform_18, window_bounds = array<i64: 32, 3>}, {pipeline_mode = #tpu.pipeline_mode<synchronous>, transform_indices = @transform_19, window_bounds = array<i64: 1, 3>}, {transform_indices = @transform_20, window_bounds = array<i64: 1, 1, 3>}]} {
    %c0 = arith.constant 0 : index
    %c0_0 = arith.constant 0 : index
    %c0_1 = arith.constant 0 : index
    %0 = vector.load %arg1[%c0, %c0_0, %c0_1] : memref<1x8x32xf32, #tpu.memory_space<vmem>>, vector<1x8x32xf32>
    %1 = vector.shape_cast %0 : vector<1x8x32xf32> to vector<8x32xf32>
    %c0_2 = arith.constant 0 : index
    %c0_3 = arith.constant 0 : index
    %c0_4 = arith.constant 0 : index
    %2 = vector.load %arg2[%c0_2, %c0_3, %c0_4] : memref<1x1x8xf32, #tpu.memory_space<vmem>>, vector<1x1x8xf32>
    %3 = vector.shape_cast %2 : vector<1x1x8xf32> to vector<1x8xf32>
    %c0_5 = arith.constant 0 : index
    %c0_6 = arith.constant 0 : index
    %4 = vector.load %arg3[%c0_5, %c0_6] : memref<1x32xf32, #tpu.memory_space<vmem>>, vector<1x32xf32>
    %c0_7 = arith.constant 0 : index
    %c0_8 = arith.constant 0 : index
    %5 = vector.load %arg4[%c0_7, %c0_8] : memref<1x32xf32, #tpu.memory_space<vmem>>, vector<1x32xf32>
    %cst = arith.constant dense<0.000000e+00> : vector<8xf32>
    %6 = vector.multi_reduction <add>, %1, %cst [1] : vector<8x32xf32> to vector<8xf32>
    %7 = vector.shape_cast %6 : vector<8xf32> to vector<8x1xf32>
    %cst_9 = arith.constant 3.200000e+01 : f32
    %8 = vector.broadcast %cst_9 : f32 to vector<8x1xf32>
    %9 = arith.divf %7, %8 : vector<8x1xf32>
    %10 = vector.broadcast %9 : vector<8x1xf32> to vector<8x32xf32>
    %11 = arith.subf %1, %10 : vector<8x32xf32>
    %12 = arith.mulf %11, %11 : vector<8x32xf32>
    %cst_10 = arith.constant dense<0.000000e+00> : vector<8xf32>
    %13 = vector.multi_reduction <add>, %12, %cst_10 [1] : vector<8x32xf32> to vector<8xf32>
    %14 = vector.shape_cast %13 : vector<8xf32> to vector<8x1xf32>
    %cst_11 = arith.constant 3.200000e+01 : f32
    %15 = vector.broadcast %cst_11 : f32 to vector<8x1xf32>
    %16 = arith.divf %14, %15 : vector<8x1xf32>
    %17 = vector.broadcast %9 : vector<8x1xf32> to vector<8x32xf32>
    %18 = arith.subf %1, %17 : vector<8x32xf32>
    %cst_12 = arith.constant 9.99999996E-13 : f32
    %19 = vector.broadcast %cst_12 : f32 to vector<8x1xf32>
    %20 = arith.addf %16, %19 : vector<8x1xf32>
    %21 = math.rsqrt %20 : vector<8x1xf32>
    %22 = vector.broadcast %21 : vector<8x1xf32> to vector<8x32xf32>
    %23 = arith.mulf %18, %22 : vector<8x32xf32>
    %24 = vector.broadcast %4 : vector<1x32xf32> to vector<8x32xf32>
    %25 = arith.mulf %23, %24 : vector<8x32xf32>
    %26 = vector.broadcast %5 : vector<1x32xf32> to vector<8x32xf32>
    %27 = arith.addf %25, %26 : vector<8x32xf32>
    %c0_13 = arith.constant 0 : index
    %c0_14 = arith.constant 0 : index
    %c0_15 = arith.constant 0 : index
    %28 = vector.load %arg5[%c0_13, %c0_14, %c0_15] : memref<2x32x96xbf16, #tpu.memory_space<vmem>>, vector<1x32x96xbf16>
    %29 = vector.shape_cast %28 : vector<1x32x96xbf16> to vector<32x96xbf16>
    %30 = arith.truncf %27 : vector<8x32xf32> to vector<8x32xbf16>
    %cst_16 = arith.constant dense<0.000000e+00> : vector<8x96xf32>
    %31 = tpu.matmul %30, %29, %cst_16 {dimension_numbers = #tpu.dot_dimension_numbers<[1], [0], [0], [1], [0, 0, 1, 1], [], []>} : vector<8x32xbf16>, vector<32x96xbf16>, vector<8x96xf32> -> vector<8x96xf32>
    %c0_17 = arith.constant 0 : index
    %c0_18 = arith.constant 0 : index
    %c0_19 = arith.constant 0 : index
    %32 = vector.load %arg6[%c0_17, %c0_18, %c0_19] : memref<2x1x96xf32, #tpu.memory_space<vmem>>, vector<1x1x96xf32>
    %33 = vector.shape_cast %32 : vector<1x1x96xf32> to vector<1x96xf32>
    %34 = vector.broadcast %33 : vector<1x96xf32> to vector<8x96xf32>
    %35 = arith.addf %31, %34 : vector<8x96xf32>
    %36 = vector.extract_strided_slice %35 {offsets = [0, 0], sizes = [8, 8], strides = [1, 1]} : vector<8x96xf32> to vector<8x8xf32>
    %37 = arith.truncf %36 : vector<8x8xf32> to vector<8x8xbf16>
    %38 = vector.extract_strided_slice %35 {offsets = [0, 32], sizes = [8, 8], strides = [1, 1]} : vector<8x96xf32> to vector<8x8xf32>
    %39 = arith.truncf %38 : vector<8x8xf32> to vector<8x8xbf16>
    %40 = vector.extract_strided_slice %35 {offsets = [0, 64], sizes = [8, 8], strides = [1, 1]} : vector<8x96xf32> to vector<8x8xf32>
    %41 = arith.truncf %40 : vector<8x8xf32> to vector<8x8xbf16>
    %cst_20 = arith.constant dense<0.000000e+00> : vector<8x8xf32>
    %42 = tpu.matmul %37, %39, %cst_20 {dimension_numbers = #tpu.dot_dimension_numbers<[1], [1], [0], [0], [0, 0, 1, 0], [], []>} : vector<8x8xbf16>, vector<8x8xbf16>, vector<8x8xf32> -> vector<8x8xf32>
    %cst_21 = arith.constant 0.353553385 : f32
    %43 = vector.broadcast %cst_21 : f32 to vector<8x8xf32>
    %44 = arith.mulf %42, %43 : vector<8x8xf32>
    %45 = vector.broadcast %3 : vector<1x8xf32> to vector<8x8xf32>
    %46 = arith.addf %44, %45 : vector<8x8xf32>
    %cst_22 = arith.constant dense<0xFF800000> : vector<8xf32>
    %47 = vector.multi_reduction <maximumf>, %46, %cst_22 [1] : vector<8x8xf32> to vector<8xf32>
    %48 = vector.shape_cast %47 : vector<8xf32> to vector<8x1xf32>
    %49 = vector.broadcast %48 : vector<8x1xf32> to vector<8x8xf32>
    %50 = arith.subf %46, %49 : vector<8x8xf32>
    %51 = math.exp %50 : vector<8x8xf32>
    %cst_23 = arith.constant dense<0.000000e+00> : vector<8xf32>
    %52 = vector.multi_reduction <add>, %51, %cst_23 [1] : vector<8x8xf32> to vector<8xf32>
    %53 = vector.shape_cast %52 : vector<8xf32> to vector<8x1xf32>
    %54 = tpu.reciprocal %53 {approx = true} : vector<8x1xf32> -> vector<8x1xf32>
    %55 = vector.broadcast %54 : vector<8x1xf32> to vector<8x8xf32>
    %56 = arith.mulf %51, %55 : vector<8x8xf32>
    %57 = arith.truncf %56 : vector<8x8xf32> to vector<8x8xbf16>
    %cst_24 = arith.constant dense<0.000000e+00> : vector<8x8xf32>
    %58 = tpu.matmul %57, %41, %cst_24 {dimension_numbers = #tpu.dot_dimension_numbers<[1], [0], [0], [1], [0, 0, 1, 1], [], []>} : vector<8x8xbf16>, vector<8x8xbf16>, vector<8x8xf32> -> vector<8x8xf32>
    %59 = vector.extract_strided_slice %35 {offsets = [0, 8], sizes = [8, 8], strides = [1, 1]} : vector<8x96xf32> to vector<8x8xf32>
    %60 = arith.truncf %59 : vector<8x8xf32> to vector<8x8xbf16>
    %61 = vector.extract_strided_slice %35 {offsets = [0, 40], sizes = [8, 8], strides = [1, 1]} : vector<8x96xf32> to vector<8x8xf32>
    %62 = arith.truncf %61 : vector<8x8xf32> to vector<8x8xbf16>
    %63 = vector.extract_strided_slice %35 {offsets = [0, 72], sizes = [8, 8], strides = [1, 1]} : vector<8x96xf32> to vector<8x8xf32>
    %64 = arith.truncf %63 : vector<8x8xf32> to vector<8x8xbf16>
    %cst_25 = arith.constant dense<0.000000e+00> : vector<8x8xf32>
    %65 = tpu.matmul %60, %62, %cst_25 {dimension_numbers = #tpu.dot_dimension_numbers<[1], [1], [0], [0], [0, 0, 1, 0], [], []>} : vector<8x8xbf16>, vector<8x8xbf16>, vector<8x8xf32> -> vector<8x8xf32>
    %cst_26 = arith.constant 0.353553385 : f32
    %66 = vector.broadcast %cst_26 : f32 to vector<8x8xf32>
    %67 = arith.mulf %65, %66 : vector<8x8xf32>
    %68 = vector.broadcast %3 : vector<1x8xf32> to vector<8x8xf32>
    %69 = arith.addf %67, %68 : vector<8x8xf32>
    %cst_27 = arith.constant dense<0xFF800000> : vector<8xf32>
    %70 = vector.multi_reduction <maximumf>, %69, %cst_27 [1] : vector<8x8xf32> to vector<8xf32>
    %71 = vector.shape_cast %70 : vector<8xf32> to vector<8x1xf32>
    %72 = vector.broadcast %71 : vector<8x1xf32> to vector<8x8xf32>
    %73 = arith.subf %69, %72 : vector<8x8xf32>
    %74 = math.exp %73 : vector<8x8xf32>
    %cst_28 = arith.constant dense<0.000000e+00> : vector<8xf32>
    %75 = vector.multi_reduction <add>, %74, %cst_28 [1] : vector<8x8xf32> to vector<8xf32>
    %76 = vector.shape_cast %75 : vector<8xf32> to vector<8x1xf32>
    %77 = tpu.reciprocal %76 {approx = true} : vector<8x1xf32> -> vector<8x1xf32>
    %78 = vector.broadcast %77 : vector<8x1xf32> to vector<8x8xf32>
    %79 = arith.mulf %74, %78 : vector<8x8xf32>
    %80 = arith.truncf %79 : vector<8x8xf32> to vector<8x8xbf16>
    %cst_29 = arith.constant dense<0.000000e+00> : vector<8x8xf32>
    %81 = tpu.matmul %80, %64, %cst_29 {dimension_numbers = #tpu.dot_dimension_numbers<[1], [0], [0], [1], [0, 0, 1, 1], [], []>} : vector<8x8xbf16>, vector<8x8xbf16>, vector<8x8xf32> -> vector<8x8xf32>
    %82 = vector.extract_strided_slice %35 {offsets = [0, 16], sizes = [8, 8], strides = [1, 1]} : vector<8x96xf32> to vector<8x8xf32>
    %83 = arith.truncf %82 : vector<8x8xf32> to vector<8x8xbf16>
    %84 = vector.extract_strided_slice %35 {offsets = [0, 48], sizes = [8, 8], strides = [1, 1]} : vector<8x96xf32> to vector<8x8xf32>
    %85 = arith.truncf %84 : vector<8x8xf32> to vector<8x8xbf16>
    %86 = vector.extract_strided_slice %35 {offsets = [0, 80], sizes = [8, 8], strides = [1, 1]} : vector<8x96xf32> to vector<8x8xf32>
    %87 = arith.truncf %86 : vector<8x8xf32> to vector<8x8xbf16>
    %cst_30 = arith.constant dense<0.000000e+00> : vector<8x8xf32>
    %88 = tpu.matmul %83, %85, %cst_30 {dimension_numbers = #tpu.dot_dimension_numbers<[1], [1], [0], [0], [0, 0, 1, 0], [], []>} : vector<8x8xbf16>, vector<8x8xbf16>, vector<8x8xf32> -> vector<8x8xf32>
    %cst_31 = arith.constant 0.353553385 : f32
    %89 = vector.broadcast %cst_31 : f32 to vector<8x8xf32>
    %90 = arith.mulf %88, %89 : vector<8x8xf32>
    %91 = vector.broadcast %3 : vector<1x8xf32> to vector<8x8xf32>
    %92 = arith.addf %90, %91 : vector<8x8xf32>
    %cst_32 = arith.constant dense<0xFF800000> : vector<8xf32>
    %93 = vector.multi_reduction <maximumf>, %92, %cst_32 [1] : vector<8x8xf32> to vector<8xf32>
    %94 = vector.shape_cast %93 : vector<8xf32> to vector<8x1xf32>
    %95 = vector.broadcast %94 : vector<8x1xf32> to vector<8x8xf32>
    %96 = arith.subf %92, %95 : vector<8x8xf32>
    %97 = math.exp %96 : vector<8x8xf32>
    %cst_33 = arith.constant dense<0.000000e+00> : vector<8xf32>
    %98 = vector.multi_reduction <add>, %97, %cst_33 [1] : vector<8x8xf32> to vector<8xf32>
    %99 = vector.shape_cast %98 : vector<8xf32> to vector<8x1xf32>
    %100 = tpu.reciprocal %99 {approx = true} : vector<8x1xf32> -> vector<8x1xf32>
    %101 = vector.broadcast %100 : vector<8x1xf32> to vector<8x8xf32>
    %102 = arith.mulf %97, %101 : vector<8x8xf32>
    %103 = arith.truncf %102 : vector<8x8xf32> to vector<8x8xbf16>
    %cst_34 = arith.constant dense<0.000000e+00> : vector<8x8xf32>
    %104 = tpu.matmul %103, %87, %cst_34 {dimension_numbers = #tpu.dot_dimension_numbers<[1], [0], [0], [1], [0, 0, 1, 1], [], []>} : vector<8x8xbf16>, vector<8x8xbf16>, vector<8x8xf32> -> vector<8x8xf32>
    %105 = vector.extract_strided_slice %35 {offsets = [0, 24], sizes = [8, 8], strides = [1, 1]} : vector<8x96xf32> to vector<8x8xf32>
    %106 = arith.truncf %105 : vector<8x8xf32> to vector<8x8xbf16>
    %107 = vector.extract_strided_slice %35 {offsets = [0, 56], sizes = [8, 8], strides = [1, 1]} : vector<8x96xf32> to vector<8x8xf32>
    %108 = arith.truncf %107 : vector<8x8xf32> to vector<8x8xbf16>
    %109 = vector.extract_strided_slice %35 {offsets = [0, 88], sizes = [8, 8], strides = [1, 1]} : vector<8x96xf32> to vector<8x8xf32>
    %110 = arith.truncf %109 : vector<8x8xf32> to vector<8x8xbf16>
    %cst_35 = arith.constant dense<0.000000e+00> : vector<8x8xf32>
    %111 = tpu.matmul %106, %108, %cst_35 {dimension_numbers = #tpu.dot_dimension_numbers<[1], [1], [0], [0], [0, 0, 1, 0], [], []>} : vector<8x8xbf16>, vector<8x8xbf16>, vector<8x8xf32> -> vector<8x8xf32>
    %cst_36 = arith.constant 0.353553385 : f32
    %112 = vector.broadcast %cst_36 : f32 to vector<8x8xf32>
    %113 = arith.mulf %111, %112 : vector<8x8xf32>
    %114 = vector.broadcast %3 : vector<1x8xf32> to vector<8x8xf32>
    %115 = arith.addf %113, %114 : vector<8x8xf32>
    %cst_37 = arith.constant dense<0xFF800000> : vector<8xf32>
    %116 = vector.multi_reduction <maximumf>, %115, %cst_37 [1] : vector<8x8xf32> to vector<8xf32>
    %117 = vector.shape_cast %116 : vector<8xf32> to vector<8x1xf32>
    %118 = vector.broadcast %117 : vector<8x1xf32> to vector<8x8xf32>
    %119 = arith.subf %115, %118 : vector<8x8xf32>
    %120 = math.exp %119 : vector<8x8xf32>
    %cst_38 = arith.constant dense<0.000000e+00> : vector<8xf32>
    %121 = vector.multi_reduction <add>, %120, %cst_38 [1] : vector<8x8xf32> to vector<8xf32>
    %122 = vector.shape_cast %121 : vector<8xf32> to vector<8x1xf32>
    %123 = tpu.reciprocal %122 {approx = true} : vector<8x1xf32> -> vector<8x1xf32>
    %124 = vector.broadcast %123 : vector<8x1xf32> to vector<8x8xf32>
    %125 = arith.mulf %120, %124 : vector<8x8xf32>
    %126 = arith.truncf %125 : vector<8x8xf32> to vector<8x8xbf16>
    %cst_39 = arith.constant dense<0.000000e+00> : vector<8x8xf32>
    %127 = tpu.matmul %126, %110, %cst_39 {dimension_numbers = #tpu.dot_dimension_numbers<[1], [0], [0], [1], [0, 0, 1, 1], [], []>} : vector<8x8xbf16>, vector<8x8xbf16>, vector<8x8xf32> -> vector<8x8xf32>
    %128 = tpu.concatenate %58, %81, %104, %127 in 1 : vector<8x8xf32>, vector<8x8xf32>, vector<8x8xf32>, vector<8x8xf32> -> vector<8x32xf32>
    %c0_40 = arith.constant 0 : index
    %c0_41 = arith.constant 0 : index
    %c0_42 = arith.constant 0 : index
    %129 = vector.load %arg7[%c0_40, %c0_41, %c0_42] : memref<2x32x32xbf16, #tpu.memory_space<vmem>>, vector<1x32x32xbf16>
    %130 = vector.shape_cast %129 : vector<1x32x32xbf16> to vector<32x32xbf16>
    %131 = arith.truncf %128 : vector<8x32xf32> to vector<8x32xbf16>
    %cst_43 = arith.constant dense<0.000000e+00> : vector<8x32xf32>
    %132 = tpu.matmul %131, %130, %cst_43 {dimension_numbers = #tpu.dot_dimension_numbers<[1], [0], [0], [1], [0, 0, 1, 1], [], []>} : vector<8x32xbf16>, vector<32x32xbf16>, vector<8x32xf32> -> vector<8x32xf32>
    %c0_44 = arith.constant 0 : index
    %c0_45 = arith.constant 0 : index
    %c0_46 = arith.constant 0 : index
    %133 = vector.load %arg8[%c0_44, %c0_45, %c0_46] : memref<2x1x32xf32, #tpu.memory_space<vmem>>, vector<1x1x32xf32>
    %134 = vector.shape_cast %133 : vector<1x1x32xf32> to vector<1x32xf32>
    %135 = vector.broadcast %134 : vector<1x32xf32> to vector<8x32xf32>
    %136 = arith.addf %132, %135 : vector<8x32xf32>
    %137 = arith.addf %136, %27 : vector<8x32xf32>
    %c0_47 = arith.constant 0 : index
    %c0_48 = arith.constant 0 : index
    %c0_49 = arith.constant 0 : index
    %138 = vector.load %arg9[%c0_47, %c0_48, %c0_49] : memref<2x1x32xf32, #tpu.memory_space<vmem>>, vector<1x1x32xf32>
    %139 = vector.shape_cast %138 : vector<1x1x32xf32> to vector<1x32xf32>
    %c0_50 = arith.constant 0 : index
    %c0_51 = arith.constant 0 : index
    %c0_52 = arith.constant 0 : index
    %140 = vector.load %arg10[%c0_50, %c0_51, %c0_52] : memref<2x1x32xf32, #tpu.memory_space<vmem>>, vector<1x1x32xf32>
    %141 = vector.shape_cast %140 : vector<1x1x32xf32> to vector<1x32xf32>
    %cst_53 = arith.constant dense<0.000000e+00> : vector<8xf32>
    %142 = vector.multi_reduction <add>, %137, %cst_53 [1] : vector<8x32xf32> to vector<8xf32>
    %143 = vector.shape_cast %142 : vector<8xf32> to vector<8x1xf32>
    %cst_54 = arith.constant 3.200000e+01 : f32
    %144 = vector.broadcast %cst_54 : f32 to vector<8x1xf32>
    %145 = arith.divf %143, %144 : vector<8x1xf32>
    %146 = vector.broadcast %145 : vector<8x1xf32> to vector<8x32xf32>
    %147 = arith.subf %137, %146 : vector<8x32xf32>
    %148 = arith.mulf %147, %147 : vector<8x32xf32>
    %cst_55 = arith.constant dense<0.000000e+00> : vector<8xf32>
    %149 = vector.multi_reduction <add>, %148, %cst_55 [1] : vector<8x32xf32> to vector<8xf32>
    %150 = vector.shape_cast %149 : vector<8xf32> to vector<8x1xf32>
    %cst_56 = arith.constant 3.200000e+01 : f32
    %151 = vector.broadcast %cst_56 : f32 to vector<8x1xf32>
    %152 = arith.divf %150, %151 : vector<8x1xf32>
    %153 = vector.broadcast %145 : vector<8x1xf32> to vector<8x32xf32>
    %154 = arith.subf %137, %153 : vector<8x32xf32>
    %cst_57 = arith.constant 9.99999996E-13 : f32
    %155 = vector.broadcast %cst_57 : f32 to vector<8x1xf32>
    %156 = arith.addf %152, %155 : vector<8x1xf32>
    %157 = math.rsqrt %156 : vector<8x1xf32>
    %158 = vector.broadcast %157 : vector<8x1xf32> to vector<8x32xf32>
    %159 = arith.mulf %154, %158 : vector<8x32xf32>
    %160 = vector.broadcast %139 : vector<1x32xf32> to vector<8x32xf32>
    %161 = arith.mulf %159, %160 : vector<8x32xf32>
    %162 = vector.broadcast %141 : vector<1x32xf32> to vector<8x32xf32>
    %163 = arith.addf %161, %162 : vector<8x32xf32>
    %c0_58 = arith.constant 0 : index
    %c0_59 = arith.constant 0 : index
    %c0_60 = arith.constant 0 : index
    %164 = vector.load %arg11[%c0_58, %c0_59, %c0_60] : memref<2x32x64xbf16, #tpu.memory_space<vmem>>, vector<1x32x64xbf16>
    %165 = vector.shape_cast %164 : vector<1x32x64xbf16> to vector<32x64xbf16>
    %166 = arith.truncf %163 : vector<8x32xf32> to vector<8x32xbf16>
    %cst_61 = arith.constant dense<0.000000e+00> : vector<8x64xf32>
    %167 = tpu.matmul %166, %165, %cst_61 {dimension_numbers = #tpu.dot_dimension_numbers<[1], [0], [0], [1], [0, 0, 1, 1], [], []>} : vector<8x32xbf16>, vector<32x64xbf16>, vector<8x64xf32> -> vector<8x64xf32>
    %c0_62 = arith.constant 0 : index
    %c0_63 = arith.constant 0 : index
    %c0_64 = arith.constant 0 : index
    %168 = vector.load %arg12[%c0_62, %c0_63, %c0_64] : memref<2x1x64xf32, #tpu.memory_space<vmem>>, vector<1x1x64xf32>
    %169 = vector.shape_cast %168 : vector<1x1x64xf32> to vector<1x64xf32>
    %170 = vector.broadcast %169 : vector<1x64xf32> to vector<8x64xf32>
    %171 = arith.addf %167, %170 : vector<8x64xf32>
    %cst_65 = arith.constant 5.000000e-01 : f32
    %172 = vector.broadcast %cst_65 : f32 to vector<8x64xf32>
    %173 = arith.mulf %172, %171 : vector<8x64xf32>
    %cst_66 = arith.constant 0.707106769 : f32
    %174 = vector.broadcast %cst_66 : f32 to vector<8x64xf32>
    %175 = arith.mulf %171, %174 : vector<8x64xf32>
    %176 = math.erf %175 : vector<8x64xf32>
    %cst_67 = arith.constant 1.000000e+00 : f32
    %177 = vector.broadcast %cst_67 : f32 to vector<8x64xf32>
    %178 = arith.addf %177, %176 : vector<8x64xf32>
    %179 = arith.mulf %173, %178 : vector<8x64xf32>
    %c0_68 = arith.constant 0 : index
    %c0_69 = arith.constant 0 : index
    %c0_70 = arith.constant 0 : index
    %180 = vector.load %arg13[%c0_68, %c0_69, %c0_70] : memref<2x64x32xbf16, #tpu.memory_space<vmem>>, vector<1x64x32xbf16>
    %181 = vector.shape_cast %180 : vector<1x64x32xbf16> to vector<64x32xbf16>
    %182 = arith.truncf %179 : vector<8x64xf32> to vector<8x64xbf16>
    %cst_71 = arith.constant dense<0.000000e+00> : vector<8x32xf32>
    %183 = tpu.matmul %182, %181, %cst_71 {dimension_numbers = #tpu.dot_dimension_numbers<[1], [0], [0], [1], [0, 0, 1, 1], [], []>} : vector<8x64xbf16>, vector<64x32xbf16>, vector<8x32xf32> -> vector<8x32xf32>
    %c0_72 = arith.constant 0 : index
    %c0_73 = arith.constant 0 : index
    %c0_74 = arith.constant 0 : index
    %184 = vector.load %arg14[%c0_72, %c0_73, %c0_74] : memref<2x1x32xf32, #tpu.memory_space<vmem>>, vector<1x1x32xf32>
    %185 = vector.shape_cast %184 : vector<1x1x32xf32> to vector<1x32xf32>
    %186 = vector.broadcast %185 : vector<1x32xf32> to vector<8x32xf32>
    %187 = arith.addf %183, %186 : vector<8x32xf32>
    %188 = arith.addf %187, %163 : vector<8x32xf32>
    %c0_75 = arith.constant 0 : index
    %c0_76 = arith.constant 0 : index
    %c0_77 = arith.constant 0 : index
    %189 = vector.load %arg15[%c0_75, %c0_76, %c0_77] : memref<2x1x32xf32, #tpu.memory_space<vmem>>, vector<1x1x32xf32>
    %190 = vector.shape_cast %189 : vector<1x1x32xf32> to vector<1x32xf32>
    %c0_78 = arith.constant 0 : index
    %c0_79 = arith.constant 0 : index
    %c0_80 = arith.constant 0 : index
    %191 = vector.load %arg16[%c0_78, %c0_79, %c0_80] : memref<2x1x32xf32, #tpu.memory_space<vmem>>, vector<1x1x32xf32>
    %192 = vector.shape_cast %191 : vector<1x1x32xf32> to vector<1x32xf32>
    %cst_81 = arith.constant dense<0.000000e+00> : vector<8xf32>
    %193 = vector.multi_reduction <add>, %188, %cst_81 [1] : vector<8x32xf32> to vector<8xf32>
    %194 = vector.shape_cast %193 : vector<8xf32> to vector<8x1xf32>
    %cst_82 = arith.constant 3.200000e+01 : f32
    %195 = vector.broadcast %cst_82 : f32 to vector<8x1xf32>
    %196 = arith.divf %194, %195 : vector<8x1xf32>
    %197 = vector.broadcast %196 : vector<8x1xf32> to vector<8x32xf32>
    %198 = arith.subf %188, %197 : vector<8x32xf32>
    %199 = arith.mulf %198, %198 : vector<8x32xf32>
    %cst_83 = arith.constant dense<0.000000e+00> : vector<8xf32>
    %200 = vector.multi_reduction <add>, %199, %cst_83 [1] : vector<8x32xf32> to vector<8xf32>
    %201 = vector.shape_cast %200 : vector<8xf32> to vector<8x1xf32>
    %cst_84 = arith.constant 3.200000e+01 : f32
    %202 = vector.broadcast %cst_84 : f32 to vector<8x1xf32>
    %203 = arith.divf %201, %202 : vector<8x1xf32>
    %204 = vector.broadcast %196 : vector<8x1xf32> to vector<8x32xf32>
    %205 = arith.subf %188, %204 : vector<8x32xf32>
    %cst_85 = arith.constant 9.99999996E-13 : f32
    %206 = vector.broadcast %cst_85 : f32 to vector<8x1xf32>
    %207 = arith.addf %203, %206 : vector<8x1xf32>
    %208 = math.rsqrt %207 : vector<8x1xf32>
    %209 = vector.broadcast %208 : vector<8x1xf32> to vector<8x32xf32>
    %210 = arith.mulf %205, %209 : vector<8x32xf32>
    %211 = vector.broadcast %190 : vector<1x32xf32> to vector<8x32xf32>
    %212 = arith.mulf %210, %211 : vector<8x32xf32>
    %213 = vector.broadcast %192 : vector<1x32xf32> to vector<8x32xf32>
    %214 = arith.addf %212, %213 : vector<8x32xf32>
    %c1 = arith.constant 1 : index
    %c0_86 = arith.constant 0 : index
    %c0_87 = arith.constant 0 : index
    %215 = vector.load %arg5[%c1, %c0_86, %c0_87] : memref<2x32x96xbf16, #tpu.memory_space<vmem>>, vector<1x32x96xbf16>
    %216 = vector.shape_cast %215 : vector<1x32x96xbf16> to vector<32x96xbf16>
    %217 = arith.truncf %214 : vector<8x32xf32> to vector<8x32xbf16>
    %cst_88 = arith.constant dense<0.000000e+00> : vector<8x96xf32>
    %218 = tpu.matmul %217, %216, %cst_88 {dimension_numbers = #tpu.dot_dimension_numbers<[1], [0], [0], [1], [0, 0, 1, 1], [], []>} : vector<8x32xbf16>, vector<32x96xbf16>, vector<8x96xf32> -> vector<8x96xf32>
    %c1_89 = arith.constant 1 : index
    %c0_90 = arith.constant 0 : index
    %c0_91 = arith.constant 0 : index
    %219 = vector.load %arg6[%c1_89, %c0_90, %c0_91] : memref<2x1x96xf32, #tpu.memory_space<vmem>>, vector<1x1x96xf32>
    %220 = vector.shape_cast %219 : vector<1x1x96xf32> to vector<1x96xf32>
    %221 = vector.broadcast %220 : vector<1x96xf32> to vector<8x96xf32>
    %222 = arith.addf %218, %221 : vector<8x96xf32>
    %223 = vector.extract_strided_slice %222 {offsets = [0, 0], sizes = [8, 8], strides = [1, 1]} : vector<8x96xf32> to vector<8x8xf32>
    %224 = arith.truncf %223 : vector<8x8xf32> to vector<8x8xbf16>
    %225 = vector.extract_strided_slice %222 {offsets = [0, 32], sizes = [8, 8], strides = [1, 1]} : vector<8x96xf32> to vector<8x8xf32>
    %226 = arith.truncf %225 : vector<8x8xf32> to vector<8x8xbf16>
    %227 = vector.extract_strided_slice %222 {offsets = [0, 64], sizes = [8, 8], strides = [1, 1]} : vector<8x96xf32> to vector<8x8xf32>
    %228 = arith.truncf %227 : vector<8x8xf32> to vector<8x8xbf16>
    %cst_92 = arith.constant dense<0.000000e+00> : vector<8x8xf32>
    %229 = tpu.matmul %224, %226, %cst_92 {dimension_numbers = #tpu.dot_dimension_numbers<[1], [1], [0], [0], [0, 0, 1, 0], [], []>} : vector<8x8xbf16>, vector<8x8xbf16>, vector<8x8xf32> -> vector<8x8xf32>
    %cst_93 = arith.constant 0.353553385 : f32
    %230 = vector.broadcast %cst_93 : f32 to vector<8x8xf32>
    %231 = arith.mulf %229, %230 : vector<8x8xf32>
    %232 = vector.broadcast %3 : vector<1x8xf32> to vector<8x8xf32>
    %233 = arith.addf %231, %232 : vector<8x8xf32>
    %cst_94 = arith.constant dense<0xFF800000> : vector<8xf32>
    %234 = vector.multi_reduction <maximumf>, %233, %cst_94 [1] : vector<8x8xf32> to vector<8xf32>
    %235 = vector.shape_cast %234 : vector<8xf32> to vector<8x1xf32>
    %236 = vector.broadcast %235 : vector<8x1xf32> to vector<8x8xf32>
    %237 = arith.subf %233, %236 : vector<8x8xf32>
    %238 = math.exp %237 : vector<8x8xf32>
    %cst_95 = arith.constant dense<0.000000e+00> : vector<8xf32>
    %239 = vector.multi_reduction <add>, %238, %cst_95 [1] : vector<8x8xf32> to vector<8xf32>
    %240 = vector.shape_cast %239 : vector<8xf32> to vector<8x1xf32>
    %241 = tpu.reciprocal %240 {approx = true} : vector<8x1xf32> -> vector<8x1xf32>
    %242 = vector.broadcast %241 : vector<8x1xf32> to vector<8x8xf32>
    %243 = arith.mulf %238, %242 : vector<8x8xf32>
    %244 = arith.truncf %243 : vector<8x8xf32> to vector<8x8xbf16>
    %cst_96 = arith.constant dense<0.000000e+00> : vector<8x8xf32>
    %245 = tpu.matmul %244, %228, %cst_96 {dimension_numbers = #tpu.dot_dimension_numbers<[1], [0], [0], [1], [0, 0, 1, 1], [], []>} : vector<8x8xbf16>, vector<8x8xbf16>, vector<8x8xf32> -> vector<8x8xf32>
    %246 = vector.extract_strided_slice %222 {offsets = [0, 8], sizes = [8, 8], strides = [1, 1]} : vector<8x96xf32> to vector<8x8xf32>
    %247 = arith.truncf %246 : vector<8x8xf32> to vector<8x8xbf16>
    %248 = vector.extract_strided_slice %222 {offsets = [0, 40], sizes = [8, 8], strides = [1, 1]} : vector<8x96xf32> to vector<8x8xf32>
    %249 = arith.truncf %248 : vector<8x8xf32> to vector<8x8xbf16>
    %250 = vector.extract_strided_slice %222 {offsets = [0, 72], sizes = [8, 8], strides = [1, 1]} : vector<8x96xf32> to vector<8x8xf32>
    %251 = arith.truncf %250 : vector<8x8xf32> to vector<8x8xbf16>
    %cst_97 = arith.constant dense<0.000000e+00> : vector<8x8xf32>
    %252 = tpu.matmul %247, %249, %cst_97 {dimension_numbers = #tpu.dot_dimension_numbers<[1], [1], [0], [0], [0, 0, 1, 0], [], []>} : vector<8x8xbf16>, vector<8x8xbf16>, vector<8x8xf32> -> vector<8x8xf32>
    %cst_98 = arith.constant 0.353553385 : f32
    %253 = vector.broadcast %cst_98 : f32 to vector<8x8xf32>
    %254 = arith.mulf %252, %253 : vector<8x8xf32>
    %255 = vector.broadcast %3 : vector<1x8xf32> to vector<8x8xf32>
    %256 = arith.addf %254, %255 : vector<8x8xf32>
    %cst_99 = arith.constant dense<0xFF800000> : vector<8xf32>
    %257 = vector.multi_reduction <maximumf>, %256, %cst_99 [1] : vector<8x8xf32> to vector<8xf32>
    %258 = vector.shape_cast %257 : vector<8xf32> to vector<8x1xf32>
    %259 = vector.broadcast %258 : vector<8x1xf32> to vector<8x8xf32>
    %260 = arith.subf %256, %259 : vector<8x8xf32>
    %261 = math.exp %260 : vector<8x8xf32>
    %cst_100 = arith.constant dense<0.000000e+00> : vector<8xf32>
    %262 = vector.multi_reduction <add>, %261, %cst_100 [1] : vector<8x8xf32> to vector<8xf32>
    %263 = vector.shape_cast %262 : vector<8xf32> to vector<8x1xf32>
    %264 = tpu.reciprocal %263 {approx = true} : vector<8x1xf32> -> vector<8x1xf32>
    %265 = vector.broadcast %264 : vector<8x1xf32> to vector<8x8xf32>
    %266 = arith.mulf %261, %265 : vector<8x8xf32>
    %267 = arith.truncf %266 : vector<8x8xf32> to vector<8x8xbf16>
    %cst_101 = arith.constant dense<0.000000e+00> : vector<8x8xf32>
    %268 = tpu.matmul %267, %251, %cst_101 {dimension_numbers = #tpu.dot_dimension_numbers<[1], [0], [0], [1], [0, 0, 1, 1], [], []>} : vector<8x8xbf16>, vector<8x8xbf16>, vector<8x8xf32> -> vector<8x8xf32>
    %269 = vector.extract_strided_slice %222 {offsets = [0, 16], sizes = [8, 8], strides = [1, 1]} : vector<8x96xf32> to vector<8x8xf32>
    %270 = arith.truncf %269 : vector<8x8xf32> to vector<8x8xbf16>
    %271 = vector.extract_strided_slice %222 {offsets = [0, 48], sizes = [8, 8], strides = [1, 1]} : vector<8x96xf32> to vector<8x8xf32>
    %272 = arith.truncf %271 : vector<8x8xf32> to vector<8x8xbf16>
    %273 = vector.extract_strided_slice %222 {offsets = [0, 80], sizes = [8, 8], strides = [1, 1]} : vector<8x96xf32> to vector<8x8xf32>
    %274 = arith.truncf %273 : vector<8x8xf32> to vector<8x8xbf16>
    %cst_102 = arith.constant dense<0.000000e+00> : vector<8x8xf32>
    %275 = tpu.matmul %270, %272, %cst_102 {dimension_numbers = #tpu.dot_dimension_numbers<[1], [1], [0], [0], [0, 0, 1, 0], [], []>} : vector<8x8xbf16>, vector<8x8xbf16>, vector<8x8xf32> -> vector<8x8xf32>
    %cst_103 = arith.constant 0.353553385 : f32
    %276 = vector.broadcast %cst_103 : f32 to vector<8x8xf32>
    %277 = arith.mulf %275, %276 : vector<8x8xf32>
    %278 = vector.broadcast %3 : vector<1x8xf32> to vector<8x8xf32>
    %279 = arith.addf %277, %278 : vector<8x8xf32>
    %cst_104 = arith.constant dense<0xFF800000> : vector<8xf32>
    %280 = vector.multi_reduction <maximumf>, %279, %cst_104 [1] : vector<8x8xf32> to vector<8xf32>
    %281 = vector.shape_cast %280 : vector<8xf32> to vector<8x1xf32>
    %282 = vector.broadcast %281 : vector<8x1xf32> to vector<8x8xf32>
    %283 = arith.subf %279, %282 : vector<8x8xf32>
    %284 = math.exp %283 : vector<8x8xf32>
    %cst_105 = arith.constant dense<0.000000e+00> : vector<8xf32>
    %285 = vector.multi_reduction <add>, %284, %cst_105 [1] : vector<8x8xf32> to vector<8xf32>
    %286 = vector.shape_cast %285 : vector<8xf32> to vector<8x1xf32>
    %287 = tpu.reciprocal %286 {approx = true} : vector<8x1xf32> -> vector<8x1xf32>
    %288 = vector.broadcast %287 : vector<8x1xf32> to vector<8x8xf32>
    %289 = arith.mulf %284, %288 : vector<8x8xf32>
    %290 = arith.truncf %289 : vector<8x8xf32> to vector<8x8xbf16>
    %cst_106 = arith.constant dense<0.000000e+00> : vector<8x8xf32>
    %291 = tpu.matmul %290, %274, %cst_106 {dimension_numbers = #tpu.dot_dimension_numbers<[1], [0], [0], [1], [0, 0, 1, 1], [], []>} : vector<8x8xbf16>, vector<8x8xbf16>, vector<8x8xf32> -> vector<8x8xf32>
    %292 = vector.extract_strided_slice %222 {offsets = [0, 24], sizes = [8, 8], strides = [1, 1]} : vector<8x96xf32> to vector<8x8xf32>
    %293 = arith.truncf %292 : vector<8x8xf32> to vector<8x8xbf16>
    %294 = vector.extract_strided_slice %222 {offsets = [0, 56], sizes = [8, 8], strides = [1, 1]} : vector<8x96xf32> to vector<8x8xf32>
    %295 = arith.truncf %294 : vector<8x8xf32> to vector<8x8xbf16>
    %296 = vector.extract_strided_slice %222 {offsets = [0, 88], sizes = [8, 8], strides = [1, 1]} : vector<8x96xf32> to vector<8x8xf32>
    %297 = arith.truncf %296 : vector<8x8xf32> to vector<8x8xbf16>
    %cst_107 = arith.constant dense<0.000000e+00> : vector<8x8xf32>
    %298 = tpu.matmul %293, %295, %cst_107 {dimension_numbers = #tpu.dot_dimension_numbers<[1], [1], [0], [0], [0, 0, 1, 0], [], []>} : vector<8x8xbf16>, vector<8x8xbf16>, vector<8x8xf32> -> vector<8x8xf32>
    %cst_108 = arith.constant 0.353553385 : f32
    %299 = vector.broadcast %cst_108 : f32 to vector<8x8xf32>
    %300 = arith.mulf %298, %299 : vector<8x8xf32>
    %301 = vector.broadcast %3 : vector<1x8xf32> to vector<8x8xf32>
    %302 = arith.addf %300, %301 : vector<8x8xf32>
    %cst_109 = arith.constant dense<0xFF800000> : vector<8xf32>
    %303 = vector.multi_reduction <maximumf>, %302, %cst_109 [1] : vector<8x8xf32> to vector<8xf32>
    %304 = vector.shape_cast %303 : vector<8xf32> to vector<8x1xf32>
    %305 = vector.broadcast %304 : vector<8x1xf32> to vector<8x8xf32>
    %306 = arith.subf %302, %305 : vector<8x8xf32>
    %307 = math.exp %306 : vector<8x8xf32>
    %cst_110 = arith.constant dense<0.000000e+00> : vector<8xf32>
    %308 = vector.multi_reduction <add>, %307, %cst_110 [1] : vector<8x8xf32> to vector<8xf32>
    %309 = vector.shape_cast %308 : vector<8xf32> to vector<8x1xf32>
    %310 = tpu.reciprocal %309 {approx = true} : vector<8x1xf32> -> vector<8x1xf32>
    %311 = vector.broadcast %310 : vector<8x1xf32> to vector<8x8xf32>
    %312 = arith.mulf %307, %311 : vector<8x8xf32>
    %313 = arith.truncf %312 : vector<8x8xf32> to vector<8x8xbf16>
    %cst_111 = arith.constant dense<0.000000e+00> : vector<8x8xf32>
    %314 = tpu.matmul %313, %297, %cst_111 {dimension_numbers = #tpu.dot_dimension_numbers<[1], [0], [0], [1], [0, 0, 1, 1], [], []>} : vector<8x8xbf16>, vector<8x8xbf16>, vector<8x8xf32> -> vector<8x8xf32>
    %315 = tpu.concatenate %245, %268, %291, %314 in 1 : vector<8x8xf32>, vector<8x8xf32>, vector<8x8xf32>, vector<8x8xf32> -> vector<8x32xf32>
    %c1_112 = arith.constant 1 : index
    %c0_113 = arith.constant 0 : index
    %c0_114 = arith.constant 0 : index
    %316 = vector.load %arg7[%c1_112, %c0_113, %c0_114] : memref<2x32x32xbf16, #tpu.memory_space<vmem>>, vector<1x32x32xbf16>
    %317 = vector.shape_cast %316 : vector<1x32x32xbf16> to vector<32x32xbf16>
    %318 = arith.truncf %315 : vector<8x32xf32> to vector<8x32xbf16>
    %cst_115 = arith.constant dense<0.000000e+00> : vector<8x32xf32>
    %319 = tpu.matmul %318, %317, %cst_115 {dimension_numbers = #tpu.dot_dimension_numbers<[1], [0], [0], [1], [0, 0, 1, 1], [], []>} : vector<8x32xbf16>, vector<32x32xbf16>, vector<8x32xf32> -> vector<8x32xf32>
    %c1_116 = arith.constant 1 : index
    %c0_117 = arith.constant 0 : index
    %c0_118 = arith.constant 0 : index
    %320 = vector.load %arg8[%c1_116, %c0_117, %c0_118] : memref<2x1x32xf32, #tpu.memory_space<vmem>>, vector<1x1x32xf32>
    %321 = vector.shape_cast %320 : vector<1x1x32xf32> to vector<1x32xf32>
    %322 = vector.broadcast %321 : vector<1x32xf32> to vector<8x32xf32>
    %323 = arith.addf %319, %322 : vector<8x32xf32>
    %324 = arith.addf %323, %214 : vector<8x32xf32>
    %c1_119 = arith.constant 1 : index
    %c0_120 = arith.constant 0 : index
    %c0_121 = arith.constant 0 : index
    %325 = vector.load %arg9[%c1_119, %c0_120, %c0_121] : memref<2x1x32xf32, #tpu.memory_space<vmem>>, vector<1x1x32xf32>
    %326 = vector.shape_cast %325 : vector<1x1x32xf32> to vector<1x32xf32>
    %c1_122 = arith.constant 1 : index
    %c0_123 = arith.constant 0 : index
    %c0_124 = arith.constant 0 : index
    %327 = vector.load %arg10[%c1_122, %c0_123, %c0_124] : memref<2x1x32xf32, #tpu.memory_space<vmem>>, vector<1x1x32xf32>
    %328 = vector.shape_cast %327 : vector<1x1x32xf32> to vector<1x32xf32>
    %cst_125 = arith.constant dense<0.000000e+00> : vector<8xf32>
    %329 = vector.multi_reduction <add>, %324, %cst_125 [1] : vector<8x32xf32> to vector<8xf32>
    %330 = vector.shape_cast %329 : vector<8xf32> to vector<8x1xf32>
    %cst_126 = arith.constant 3.200000e+01 : f32
    %331 = vector.broadcast %cst_126 : f32 to vector<8x1xf32>
    %332 = arith.divf %330, %331 : vector<8x1xf32>
    %333 = vector.broadcast %332 : vector<8x1xf32> to vector<8x32xf32>
    %334 = arith.subf %324, %333 : vector<8x32xf32>
    %335 = arith.mulf %334, %334 : vector<8x32xf32>
    %cst_127 = arith.constant dense<0.000000e+00> : vector<8xf32>
    %336 = vector.multi_reduction <add>, %335, %cst_127 [1] : vector<8x32xf32> to vector<8xf32>
    %337 = vector.shape_cast %336 : vector<8xf32> to vector<8x1xf32>
    %cst_128 = arith.constant 3.200000e+01 : f32
    %338 = vector.broadcast %cst_128 : f32 to vector<8x1xf32>
    %339 = arith.divf %337, %338 : vector<8x1xf32>
    %340 = vector.broadcast %332 : vector<8x1xf32> to vector<8x32xf32>
    %341 = arith.subf %324, %340 : vector<8x32xf32>
    %cst_129 = arith.constant 9.99999996E-13 : f32
    %342 = vector.broadcast %cst_129 : f32 to vector<8x1xf32>
    %343 = arith.addf %339, %342 : vector<8x1xf32>
    %344 = math.rsqrt %343 : vector<8x1xf32>
    %345 = vector.broadcast %344 : vector<8x1xf32> to vector<8x32xf32>
    %346 = arith.mulf %341, %345 : vector<8x32xf32>
    %347 = vector.broadcast %326 : vector<1x32xf32> to vector<8x32xf32>
    %348 = arith.mulf %346, %347 : vector<8x32xf32>
    %349 = vector.broadcast %328 : vector<1x32xf32> to vector<8x32xf32>
    %350 = arith.addf %348, %349 : vector<8x32xf32>
    %c1_130 = arith.constant 1 : index
    %c0_131 = arith.constant 0 : index
    %c0_132 = arith.constant 0 : index
    %351 = vector.load %arg11[%c1_130, %c0_131, %c0_132] : memref<2x32x64xbf16, #tpu.memory_space<vmem>>, vector<1x32x64xbf16>
    %352 = vector.shape_cast %351 : vector<1x32x64xbf16> to vector<32x64xbf16>
    %353 = arith.truncf %350 : vector<8x32xf32> to vector<8x32xbf16>
    %cst_133 = arith.constant dense<0.000000e+00> : vector<8x64xf32>
    %354 = tpu.matmul %353, %352, %cst_133 {dimension_numbers = #tpu.dot_dimension_numbers<[1], [0], [0], [1], [0, 0, 1, 1], [], []>} : vector<8x32xbf16>, vector<32x64xbf16>, vector<8x64xf32> -> vector<8x64xf32>
    %c1_134 = arith.constant 1 : index
    %c0_135 = arith.constant 0 : index
    %c0_136 = arith.constant 0 : index
    %355 = vector.load %arg12[%c1_134, %c0_135, %c0_136] : memref<2x1x64xf32, #tpu.memory_space<vmem>>, vector<1x1x64xf32>
    %356 = vector.shape_cast %355 : vector<1x1x64xf32> to vector<1x64xf32>
    %357 = vector.broadcast %356 : vector<1x64xf32> to vector<8x64xf32>
    %358 = arith.addf %354, %357 : vector<8x64xf32>
    %cst_137 = arith.constant 5.000000e-01 : f32
    %359 = vector.broadcast %cst_137 : f32 to vector<8x64xf32>
    %360 = arith.mulf %359, %358 : vector<8x64xf32>
    %cst_138 = arith.constant 0.707106769 : f32
    %361 = vector.broadcast %cst_138 : f32 to vector<8x64xf32>
    %362 = arith.mulf %358, %361 : vector<8x64xf32>
    %363 = math.erf %362 : vector<8x64xf32>
    %cst_139 = arith.constant 1.000000e+00 : f32
    %364 = vector.broadcast %cst_139 : f32 to vector<8x64xf32>
    %365 = arith.addf %364, %363 : vector<8x64xf32>
    %366 = arith.mulf %360, %365 : vector<8x64xf32>
    %c1_140 = arith.constant 1 : index
    %c0_141 = arith.constant 0 : index
    %c0_142 = arith.constant 0 : index
    %367 = vector.load %arg13[%c1_140, %c0_141, %c0_142] : memref<2x64x32xbf16, #tpu.memory_space<vmem>>, vector<1x64x32xbf16>
    %368 = vector.shape_cast %367 : vector<1x64x32xbf16> to vector<64x32xbf16>
    %369 = arith.truncf %366 : vector<8x64xf32> to vector<8x64xbf16>
    %cst_143 = arith.constant dense<0.000000e+00> : vector<8x32xf32>
    %370 = tpu.matmul %369, %368, %cst_143 {dimension_numbers = #tpu.dot_dimension_numbers<[1], [0], [0], [1], [0, 0, 1, 1], [], []>} : vector<8x64xbf16>, vector<64x32xbf16>, vector<8x32xf32> -> vector<8x32xf32>
    %c1_144 = arith.constant 1 : index
    %c0_145 = arith.constant 0 : index
    %c0_146 = arith.constant 0 : index
    %371 = vector.load %arg14[%c1_144, %c0_145, %c0_146] : memref<2x1x32xf32, #tpu.memory_space<vmem>>, vector<1x1x32xf32>
    %372 = vector.shape_cast %371 : vector<1x1x32xf32> to vector<1x32xf32>
    %373 = vector.broadcast %372 : vector<1x32xf32> to vector<8x32xf32>
    %374 = arith.addf %370, %373 : vector<8x32xf32>
    %375 = arith.addf %374, %350 : vector<8x32xf32>
    %c1_147 = arith.constant 1 : index
    %c0_148 = arith.constant 0 : index
    %c0_149 = arith.constant 0 : index
    %376 = vector.load %arg15[%c1_147, %c0_148, %c0_149] : memref<2x1x32xf32, #tpu.memory_space<vmem>>, vector<1x1x32xf32>
    %377 = vector.shape_cast %376 : vector<1x1x32xf32> to vector<1x32xf32>
    %c1_150 = arith.constant 1 : index
    %c0_151 = arith.constant 0 : index
    %c0_152 = arith.constant 0 : index
    %378 = vector.load %arg16[%c1_150, %c0_151, %c0_152] : memref<2x1x32xf32, #tpu.memory_space<vmem>>, vector<1x1x32xf32>
    %379 = vector.shape_cast %378 : vector<1x1x32xf32> to vector<1x32xf32>
    %cst_153 = arith.constant dense<0.000000e+00> : vector<8xf32>
    %380 = vector.multi_reduction <add>, %375, %cst_153 [1] : vector<8x32xf32> to vector<8xf32>
    %381 = vector.shape_cast %380 : vector<8xf32> to vector<8x1xf32>
    %cst_154 = arith.constant 3.200000e+01 : f32
    %382 = vector.broadcast %cst_154 : f32 to vector<8x1xf32>
    %383 = arith.divf %381, %382 : vector<8x1xf32>
    %384 = vector.broadcast %383 : vector<8x1xf32> to vector<8x32xf32>
    %385 = arith.subf %375, %384 : vector<8x32xf32>
    %386 = arith.mulf %385, %385 : vector<8x32xf32>
    %cst_155 = arith.constant dense<0.000000e+00> : vector<8xf32>
    %387 = vector.multi_reduction <add>, %386, %cst_155 [1] : vector<8x32xf32> to vector<8xf32>
    %388 = vector.shape_cast %387 : vector<8xf32> to vector<8x1xf32>
    %cst_156 = arith.constant 3.200000e+01 : f32
    %389 = vector.broadcast %cst_156 : f32 to vector<8x1xf32>
    %390 = arith.divf %388, %389 : vector<8x1xf32>
    %391 = vector.broadcast %383 : vector<8x1xf32> to vector<8x32xf32>
    %392 = arith.subf %375, %391 : vector<8x32xf32>
    %cst_157 = arith.constant 9.99999996E-13 : f32
    %393 = vector.broadcast %cst_157 : f32 to vector<8x1xf32>
    %394 = arith.addf %390, %393 : vector<8x1xf32>
    %395 = math.rsqrt %394 : vector<8x1xf32>
    %396 = vector.broadcast %395 : vector<8x1xf32> to vector<8x32xf32>
    %397 = arith.mulf %392, %396 : vector<8x32xf32>
    %398 = vector.broadcast %377 : vector<1x32xf32> to vector<8x32xf32>
    %399 = arith.mulf %397, %398 : vector<8x32xf32>
    %400 = vector.broadcast %379 : vector<1x32xf32> to vector<8x32xf32>
    %401 = arith.addf %399, %400 : vector<8x32xf32>
    %402 = vector.extract_strided_slice %401 {offsets = [0, 0], sizes = [1, 32], strides = [1, 1]} : vector<8x32xf32> to vector<1x32xf32>
    %c0_158 = arith.constant 0 : index
    %c0_159 = arith.constant 0 : index
    %403 = vector.load %arg17[%c0_158, %c0_159] : memref<32x32xbf16, #tpu.memory_space<vmem>>, vector<32x32xbf16>
    %404 = arith.truncf %402 : vector<1x32xf32> to vector<1x32xbf16>
    %cst_160 = arith.constant dense<0.000000e+00> : vector<1x32xf32>
    %405 = tpu.matmul %404, %403, %cst_160 {dimension_numbers = #tpu.dot_dimension_numbers<[1], [0], [0], [1], [0, 0, 1, 1], [], []>} : vector<1x32xbf16>, vector<32x32xbf16>, vector<1x32xf32> -> vector<1x32xf32>
    %c0_161 = arith.constant 0 : index
    %c0_162 = arith.constant 0 : index
    %406 = vector.load %arg18[%c0_161, %c0_162] : memref<1x32xf32, #tpu.memory_space<vmem>>, vector<1x32xf32>
    %407 = arith.addf %405, %406 : vector<1x32xf32>
    %408 = math.tanh %407 : vector<1x32xf32>
    %c0_163 = arith.constant 0 : index
    %c0_164 = arith.constant 0 : index
    %409 = vector.load %arg19[%c0_163, %c0_164] : memref<32x3xbf16, #tpu.memory_space<vmem>>, vector<32x3xbf16>
    %410 = arith.truncf %408 : vector<1x32xf32> to vector<1x32xbf16>
    %cst_165 = arith.constant dense<0.000000e+00> : vector<1x3xf32>
    %411 = tpu.matmul %410, %409, %cst_165 {dimension_numbers = #tpu.dot_dimension_numbers<[1], [0], [0], [1], [0, 0, 1, 1], [], []>} : vector<1x32xbf16>, vector<32x3xbf16>, vector<1x3xf32> -> vector<1x3xf32>
    %c0_166 = arith.constant 0 : index
    %c0_167 = arith.constant 0 : index
    %412 = vector.load %arg20[%c0_166, %c0_167] : memref<1x3xf32, #tpu.memory_space<vmem>>, vector<1x3xf32>
    %413 = arith.addf %411, %412 : vector<1x3xf32>
    %c0_168 = arith.constant 0 : index
    %c0_169 = arith.constant 0 : index
    %c0_170 = arith.constant 0 : index
    %414 = vector.load %arg21[%c0_168, %c0_169, %c0_170] : memref<1x1x3xf32, #tpu.memory_space<vmem>>, vector<1x1x3xf32>
    %415 = vector.shape_cast %414 : vector<1x1x3xf32> to vector<1x3xf32>
    %416 = vector.shape_cast %413 : vector<1x3xf32> to vector<1x1x3xf32>
    tpu.vector_store %arg21[%c0_168, %c0_169, %c0_170], %416 {strides = array<i32>} : memref<1x1x3xf32, #tpu.memory_space<vmem>>, vector<1x1x3xf32>,
    return
  }
  func.func @transform_0(%arg0: i32) -> (i32, i32, i32) {
    %c0_i32 = arith.constant 0 : i32
    %c0_i32_0 = arith.constant 0 : i32
    %c0_i32_1 = arith.constant 0 : i32
    return %arg0, %c0_i32, %c0_i32_0 : i32, i32, i32
  }
  func.func @transform_1(%arg0: i32) -> (i32, i32, i32) {
    %c0_i32 = arith.constant 0 : i32
    %c0_i32_0 = arith.constant 0 : i32
    %c0_i32_1 = arith.constant 0 : i32
    return %arg0, %c0_i32, %c0_i32_0 : i32, i32, i32
  }
  func.func @transform_2(%arg0: i32) -> (i32, i32) {
    %c0_i32 = arith.constant 0 : i32
    %c0_i32_0 = arith.constant 0 : i32
    %c0_i32_1 = arith.constant 0 : i32
    return %c0_i32, %c0_i32_0 : i32, i32
  }
  func.func @transform_3(%arg0: i32) -> (i32, i32) {
    %c0_i32 = arith.constant 0 : i32
    %c0_i32_0 = arith.constant 0 : i32
    %c0_i32_1 = arith.constant 0 : i32
    return %c0_i32, %c0_i32_0 : i32, i32
  }
  func.func @transform_4(%arg0: i32) -> (i32, i32, i32) {
    %c0_i32 = arith.constant 0 : i32
    %c0_i32_0 = arith.constant 0 : i32
    %c0_i32_1 = arith.constant 0 : i32
    %c0_i32_2 = arith.constant 0 : i32
    return %c0_i32, %c0_i32_0, %c0_i32_1 : i32, i32, i32
  }
  func.func @transform_5(%arg0: i32) -> (i32, i32, i32) {
    %c0_i32 = arith.constant 0 : i32
    %c0_i32_0 = arith.constant 0 : i32
    %c0_i32_1 = arith.constant 0 : i32
    %c0_i32_2 = arith.constant 0 : i32
    return %c0_i32, %c0_i32_0, %c0_i32_1 : i32, i32, i32
  }
  func.func @transform_6(%arg0: i32) -> (i32, i32, i32) {
    %c0_i32 = arith.constant 0 : i32
    %c0_i32_0 = arith.constant 0 : i32
    %c0_i32_1 = arith.constant 0 : i32
    %c0_i32_2 = arith.constant 0 : i32
    return %c0_i32, %c0_i32_0, %c0_i32_1 : i32, i32, i32
  }
  func.func @transform_7(%arg0: i32) -> (i32, i32, i32) {
    %c0_i32 = arith.constant 0 : i32
    %c0_i32_0 = arith.constant 0 : i32
    %c0_i32_1 = arith.constant 0 : i32
    %c0_i32_2 = arith.constant 0 : i32
    return %c0_i32, %c0_i32_0, %c0_i32_1 : i32, i32, i32
  }
  func.func @transform_8(%arg0: i32) -> (i32, i32, i32) {
    %c0_i32 = arith.constant 0 : i32
    %c0_i32_0 = arith.constant 0 : i32
    %c0_i32_1 = arith.constant 0 : i32
    %c0_i32_2 = arith.constant 0 : i32
    return %c0_i32, %c0_i32_0, %c0_i32_1 : i32, i32, i32
  }
  func.func @transform_9(%arg0: i32) -> (i32, i32, i32) {
    %c0_i32 = arith.constant 0 : i32
    %c0_i32_0 = arith.constant 0 : i32
    %c0_i32_1 = arith.constant 0 : i32
    %c0_i32_2 = arith.constant 0 : i32
    return %c0_i32, %c0_i32_0, %c0_i32_1 : i32, i32, i32
  }
  func.func @transform_10(%arg0: i32) -> (i32, i32, i32) {
    %c0_i32 = arith.constant 0 : i32
    %c0_i32_0 = arith.constant 0 : i32
    %c0_i32_1 = arith.constant 0 : i32
    %c0_i32_2 = arith.constant 0 : i32
    return %c0_i32, %c0_i32_0, %c0_i32_1 : i32, i32, i32
  }
  func.func @transform_11(%arg0: i32) -> (i32, i32, i32) {
    %c0_i32 = arith.constant 0 : i32
    %c0_i32_0 = arith.constant 0 : i32
    %c0_i32_1 = arith.constant 0 : i32
    %c0_i32_2 = arith.constant 0 : i32
    return %c0_i32, %c0_i32_0, %c0_i32_1 : i32, i32, i32
  }
  func.func @transform_12(%arg0: i32) -> (i32, i32, i32) {
    %c0_i32 = arith.constant 0 : i32
    %c0_i32_0 = arith.constant 0 : i32
    %c0_i32_1 = arith.constant 0 : i32
    %c0_i32_2 = arith.constant 0 : i32
    return %c0_i32, %c0_i32_0, %c0_i32_1 : i32, i32, i32
  }
  func.func @transform_13(%arg0: i32) -> (i32, i32, i32) {
    %c0_i32 = arith.constant 0 : i32
    %c0_i32_0 = arith.constant 0 : i32
    %c0_i32_1 = arith.constant 0 : i32
    %c0_i32_2 = arith.constant 0 : i32
    return %c0_i32, %c0_i32_0, %c0_i32_1 : i32, i32, i32
  }
  func.func @transform_14(%arg0: i32) -> (i32, i32, i32) {
    %c0_i32 = arith.constant 0 : i32
    %c0_i32_0 = arith.constant 0 : i32
    %c0_i32_1 = arith.constant 0 : i32
    %c0_i32_2 = arith.constant 0 : i32
    return %c0_i32, %c0_i32_0, %c0_i32_1 : i32, i32, i32
  }
  func.func @transform_15(%arg0: i32) -> (i32, i32, i32) {
    %c0_i32 = arith.constant 0 : i32
    %c0_i32_0 = arith.constant 0 : i32
    %c0_i32_1 = arith.constant 0 : i32
    %c0_i32_2 = arith.constant 0 : i32
    return %c0_i32, %c0_i32_0, %c0_i32_1 : i32, i32, i32
  }
  func.func @transform_16(%arg0: i32) -> (i32, i32) {
    %c0_i32 = arith.constant 0 : i32
    %c0_i32_0 = arith.constant 0 : i32
    %c0_i32_1 = arith.constant 0 : i32
    return %c0_i32, %c0_i32_0 : i32, i32
  }
  func.func @transform_17(%arg0: i32) -> (i32, i32) {
    %c0_i32 = arith.constant 0 : i32
    %c0_i32_0 = arith.constant 0 : i32
    %c0_i32_1 = arith.constant 0 : i32
    return %c0_i32, %c0_i32_0 : i32, i32
  }
  func.func @transform_18(%arg0: i32) -> (i32, i32) {
    %c0_i32 = arith.constant 0 : i32
    %c0_i32_0 = arith.constant 0 : i32
    %c0_i32_1 = arith.constant 0 : i32
    return %c0_i32, %c0_i32_0 : i32, i32
  }
  func.func @transform_19(%arg0: i32) -> (i32, i32) {
    %c0_i32 = arith.constant 0 : i32
    %c0_i32_0 = arith.constant 0 : i32
    %c0_i32_1 = arith.constant 0 : i32
    return %c0_i32, %c0_i32_0 : i32, i32
  }
  func.func @transform_20(%arg0: i32) -> (i32, i32, i32) {
    %c0_i32 = arith.constant 0 : i32
    %c0_i32_0 = arith.constant 0 : i32
    %c0_i32_1 = arith.constant 0 : i32
    return %arg0, %c0_i32, %c0_i32_0 : i32, i32, i32
  }
}

</mosaic_0001>

<llo_original>
// kernel: sentiment_classifier_forward.1
$region0: #{sentiment_classifier_forward.1}
  #allocation0 [shape = 'u32[]', space=smem, size = 0x4, offset = 0x4, fixed_abs, tag = 'smem constant byte address 0x4 - core index']
  #allocation1 [shape = 'u32[72,128]{1,0:T(1,128)}', space=vmem, size = 0x9000, scoped, tag = 'internal scratch']
  %s0 = inlined_call_operand.vmem [shape: f32[2,8,32], index: 0, kind: input, shape index: {}]
  %s1 = inlined_call_operand.vmem [shape: f32[2,1,8], index: 1, kind: input, shape index: {}]
  %s2 = inlined_call_operand.vmem [shape: f32[1,32], index: 2, kind: input, shape index: {}]
  %s3 = inlined_call_operand.vmem [shape: f32[1,32], index: 3, kind: input, shape index: {}]
  %s4 = inlined_call_operand.vmem [shape: bf16[2,32,96], index: 4, kind: input, shape index: {}]
  %s5 = inlined_call_operand.vmem [shape: f32[2,1,96], index: 5, kind: input, shape index: {}]
  %s6 = inlined_call_operand.vmem [shape: bf16[2,32,32], index: 6, kind: input, shape index: {}]
  %s7 = inlined_call_operand.vmem [shape: f32[2,1,32], index: 7, kind: input, shape index: {}]
  %s8 = inlined_call_operand.vmem [shape: f32[2,1,32], index: 8, kind: input, shape index: {}]
  %s9 = inlined_call_operand.vmem [shape: f32[2,1,32], index: 9, kind: input, shape index: {}]
  %s10 = inlined_call_operand.vmem [shape: bf16[2,32,64], index: 10, kind: input, shape index: {}]
  %s11 = inlined_call_operand.vmem [shape: f32[2,1,64], index: 11, kind: input, shape index: {}]
  %s12 = inlined_call_operand.vmem [shape: bf16[2,64,32], index: 12, kind: input, shape index: {}]
  %s13 = inlined_call_operand.vmem [shape: f32[2,1,32], index: 13, kind: input, shape index: {}]
  %s14 = inlined_call_operand.vmem [shape: f32[2,1,32], index: 14, kind: input, shape index: {}]
  %s15 = inlined_call_operand.vmem [shape: f32[2,1,32], index: 15, kind: input, shape index: {}]
  %s16 = inlined_call_operand.vmem [shape: bf16[32,32], index: 16, kind: input, shape index: {}]
  %s17 = inlined_call_operand.vmem [shape: f32[1,32], index: 17, kind: input, shape index: {}]
  %s18 = inlined_call_operand.vmem [shape: bf16[32,3], index: 18, kind: input, shape index: {}]
  %s19 = inlined_call_operand.vmem [shape: f32[1,3], index: 19, kind: input, shape index: {}]
  %s20 = inlined_call_operand.hbm [shape: f32[2,1,3], index: 20, kind: output, shape index: {}]
  %s21 = sld [smem:[#allocation0]]
  $region113: #{sentiment_classifier_forward.1} parent=0
    _
  %s23 = ssub.s32 1, %s21
  %s24 = scalar_select 0, %s23, %s21
  $region1: #{sentiment_classifier_forward.1} parent=0
    #allocation2 [shape = 'u8[1024]{0}', space=vmem, size = 0x400, scoped, tag = 'output window, operand 0']
    #allocation3 [shape = 's32[2]{0}', space=sflag, size = 0x8, scoped, tag = 'scoped memory for sentiment_classifier_forward.1']
    %25 = vsyncpa [#allocation3], 0
    %s26 = scalar_lea.sflag [#allocation3], 1
    %27 = vsyncpa %s26, 0
    loop: start=0, step=1, limit=4
    $region2: #{sentiment_classifier_forward.1} parent=1 // loop_pre_header
      _
    $region3: #{sentiment_classifier_forward.1} parent=1 // loop_header
      %s29 = sphi 0, %s33
      %p30 = scmp.ge.s32.totalorder %s29, 4
      %s39 = sphi 0, %s41
      %s42 = sphi 0, %s39
      %s43 = sphi 0, %s42
      %s59 = sphi 0, %s43
      %s65 = sphi 0, %s67
      %s68 = sphi 0, %s65
      %s69 = sphi 0, %s68
      %s85 = sphi 0, %s69
      %s89 = sphi 0, %s89
      %s91 = sphi 0, %s89
      %s92 = sphi 0, %s91
      %s106 = sphi 0, %s92
      %s110 = sphi 0, %s110
      %s112 = sphi 0, %s110
      %s113 = sphi 0, %s112
      %s127 = sphi 0, %s113
      %s131 = sphi 0, %s131
      %s133 = sphi 0, %s131
      %s134 = sphi 0, %s133
      %s148 = sphi 0, %s134
      %s152 = sphi 0, %s152
      %s154 = sphi 0, %s152
      %s155 = sphi 0, %s154
      %s169 = sphi 0, %s155
      %s173 = sphi 0, %s173
      %s175 = sphi 0, %s173
      %s176 = sphi 0, %s175
      %s190 = sphi 0, %s176
      %s194 = sphi 0, %s194
      %s196 = sphi 0, %s194
      %s197 = sphi 0, %s196
      %s211 = sphi 0, %s197
      %s215 = sphi 0, %s215
      %s217 = sphi 0, %s215
      %s218 = sphi 0, %s217
      %s232 = sphi 0, %s218
      %s236 = sphi 0, %s236
      %s238 = sphi 0, %s236
      %s239 = sphi 0, %s238
      %s253 = sphi 0, %s239
      %s257 = sphi 0, %s257
      %s259 = sphi 0, %s257
      %s260 = sphi 0, %s259
      %s274 = sphi 0, %s260
      %s278 = sphi 0, %s278
      %s280 = sphi 0, %s278
      %s281 = sphi 0, %s280
      %s295 = sphi 0, %s281
      %s299 = sphi 0, %s299
      %s301 = sphi 0, %s299
      %s302 = sphi 0, %s301
      %s316 = sphi 0, %s302
      %s320 = sphi 0, %s320
      %s322 = sphi 0, %s320
      %s323 = sphi 0, %s322
      %s337 = sphi 0, %s323
      %s341 = sphi 0, %s341
      %s343 = sphi 0, %s341
      %s344 = sphi 0, %s343
      %s358 = sphi 0, %s344
      %s362 = sphi 0, %s362
      %s364 = sphi 0, %s362
      %s365 = sphi 0, %s364
      %s379 = sphi 0, %s365
      %s383 = sphi 0, %s383
      %s385 = sphi 0, %s383
      %s386 = sphi 0, %s385
      %s400 = sphi 0, %s386
      %s404 = sphi 0, %s404
      %s406 = sphi 0, %s404
      %s407 = sphi 0, %s406
      %s421 = sphi 0, %s407
      %s425 = sphi 0, %s425
      %s427 = sphi 0, %s425
      %s428 = sphi 0, %s427
      %s442 = sphi 0, %s428
      %s446 = sphi 0, %s446
      %s448 = sphi 0, %s446
      %s449 = sphi 0, %s448
      %s463 = sphi 0, %s449
      %s469 = sphi 0, %s471
      %s472 = sphi 0, %s469
      %s473 = sphi 0, %s472
      %s489 = sphi 0, %s473
    $region4: #{sentiment_classifier_forward.1} parent=1 // loop_header_branch
      %32 = sbr.rel (%p30) target = $region8
    $region5: #{sentiment_classifier_forward.1} parent=1 // loop_body
      %s34 = ssub.s32 %s29, 1
      %s35 = ssub.s32 %s29, 2
      %s36 = sadd.s32 %s29, 1
      %s37 = ssub.s32 %s29, %s36
      %p38 = scmp.eq.s32.totalorder %s37, 0
      %s40 = sadd.s32 %s39, 1
      %s41 = scalar_select %p38, %s39, %s40
      %p44 = pneg %p38
      %p45 = scmp.eq.s32.totalorder %s29, 1
      %p46 = por %p44, %p45
      %p47 = scmp.ne.s32.totalorder %s39, %s42
      %p48 = scmp.eq.s32.totalorder %s29, 0
      %p49 = por %p47, %p48
      %p50 = scmp.ne.s32.totalorder %s39, %s42
      %p51 = scmp.eq.s32.totalorder %s34, 1
      %p52 = por %p50, %p51
      %p53 = scmp.ne.s32.totalorder %s42, %s43
      %p54 = scmp.eq.s32.totalorder %s34, 0
      %p55 = por %p53, %p54
      %p56 = scmp.ne.s32.totalorder %s42, %s43
      %p57 = scmp.eq.s32.totalorder %s35, 1
      %p58 = por %p56, %p57
      %p60 = scmp.ne.s32.totalorder %s43, %s59
      %p61 = scmp.eq.s32.totalorder %s35, 0
      %p62 = por %p60, %p61
      %s63 = ssub.s32 %s29, %s36
      %p64 = scmp.eq.s32.totalorder %s63, 0
      %s66 = sadd.s32 %s65, 1
      %s67 = scalar_select %p64, %s65, %s66
      %p70 = pneg %p64
      %p71 = scmp.eq.s32.totalorder %s29, 1
      %p72 = por %p70, %p71
      %p73 = scmp.ne.s32.totalorder %s65, %s68
      %p74 = scmp.eq.s32.totalorder %s29, 0
      %p75 = por %p73, %p74
      %p76 = scmp.ne.s32.totalorder %s65, %s68
      %p77 = scmp.eq.s32.totalorder %s34, 1
      %p78 = por %p76, %p77
      %p79 = scmp.ne.s32.totalorder %s68, %s69
      %p80 = scmp.eq.s32.totalorder %s34, 0
      %p81 = por %p79, %p80
      %p82 = scmp.ne.s32.totalorder %s68, %s69
      %p83 = scmp.eq.s32.totalorder %s35, 1
      %p84 = por %p82, %p83
      %p86 = scmp.ne.s32.totalorder %s69, %s85
      %p87 = scmp.eq.s32.totalorder %s35, 0
      %p88 = por %p86, %p87
      %s90 = sadd.s32 %s89, 1
      %p93 = scmp.eq.s32.totalorder %s29, 1
      %p94 = scmp.ne.s32.totalorder %s89, %s91
      %p95 = scmp.eq.s32.totalorder %s29, 0
      %p96 = por %p94, %p95
      %p97 = scmp.ne.s32.totalorder %s89, %s91
      %p98 = scmp.eq.s32.totalorder %s34, 1
      %p99 = por %p97, %p98
      %p100 = scmp.ne.s32.totalorder %s91, %s92
      %p101 = scmp.eq.s32.totalorder %s34, 0
      %p102 = por %p100, %p101
      %p103 = scmp.ne.s32.totalorder %s91, %s92
      %p104 = scmp.eq.s32.totalorder %s35, 1
      %p105 = por %p103, %p104
      %p107 = scmp.ne.s32.totalorder %s92, %s106
      %p108 = scmp.eq.s32.totalorder %s35, 0
      %p109 = por %p107, %p108
      %s111 = sadd.s32 %s110, 1
      %p114 = scmp.eq.s32.totalorder %s29, 1
      %p115 = scmp.ne.s32.totalorder %s110, %s112
      %p116 = scmp.eq.s32.totalorder %s29, 0
      %p117 = por %p115, %p116
      %p118 = scmp.ne.s32.totalorder %s110, %s112
      %p119 = scmp.eq.s32.totalorder %s34, 1
      %p120 = por %p118, %p119
      %p121 = scmp.ne.s32.totalorder %s112, %s113
      %p122 = scmp.eq.s32.totalorder %s34, 0
      %p123 = por %p121, %p122
      %p124 = scmp.ne.s32.totalorder %s112, %s113
      %p125 = scmp.eq.s32.totalorder %s35, 1
      %p126 = por %p124, %p125
      %p128 = scmp.ne.s32.totalorder %s113, %s127
      %p129 = scmp.eq.s32.totalorder %s35, 0
      %p130 = por %p128, %p129
      %s132 = sadd.s32 %s131, 1
      %p135 = scmp.eq.s32.totalorder %s29, 1
      %p136 = scmp.ne.s32.totalorder %s131, %s133
      %p137 = scmp.eq.s32.totalorder %s29, 0
      %p138 = por %p136, %p137
      %p139 = scmp.ne.s32.totalorder %s131, %s133
      %p140 = scmp.eq.s32.totalorder %s34, 1
      %p141 = por %p139, %p140
      %p142 = scmp.ne.s32.totalorder %s133, %s134
      %p143 = scmp.eq.s32.totalorder %s34, 0
      %p144 = por %p142, %p143
      %p145 = scmp.ne.s32.totalorder %s133, %s134
      %p146 = scmp.eq.s32.totalorder %s35, 1
      %p147 = por %p145, %p146
      %p149 = scmp.ne.s32.totalorder %s134, %s148
      %p150 = scmp.eq.s32.totalorder %s35, 0
      %p151 = por %p149, %p150
      %s153 = sadd.s32 %s152, 1
      %p156 = scmp.eq.s32.totalorder %s29, 1
      %p157 = scmp.ne.s32.totalorder %s152, %s154
      %p158 = scmp.eq.s32.totalorder %s29, 0
      %p159 = por %p157, %p158
      %p160 = scmp.ne.s32.totalorder %s152, %s154
      %p161 = scmp.eq.s32.totalorder %s34, 1
      %p162 = por %p160, %p161
      %p163 = scmp.ne.s32.totalorder %s154, %s155
      %p164 = scmp.eq.s32.totalorder %s34, 0
      %p165 = por %p163, %p164
      %p166 = scmp.ne.s32.totalorder %s154, %s155
      %p167 = scmp.eq.s32.totalorder %s35, 1
      %p168 = por %p166, %p167
      %p170 = scmp.ne.s32.totalorder %s155, %s169
      %p171 = scmp.eq.s32.totalorder %s35, 0
      %p172 = por %p170, %p171
      %s174 = sadd.s32 %s173, 1
      %p177 = scmp.eq.s32.totalorder %s29, 1
      %p178 = scmp.ne.s32.totalorder %s173, %s175
      %p179 = scmp.eq.s32.totalorder %s29, 0
      %p180 = por %p178, %p179
      %p181 = scmp.ne.s32.totalorder %s173, %s175
      %p182 = scmp.eq.s32.totalorder %s34, 1
      %p183 = por %p181, %p182
      %p184 = scmp.ne.s32.totalorder %s175, %s176
      %p185 = scmp.eq.s32.totalorder %s34, 0
      %p186 = por %p184, %p185
      %p187 = scmp.ne.s32.totalorder %s175, %s176
      %p188 = scmp.eq.s32.totalorder %s35, 1
      %p189 = por %p187, %p188
      %p191 = scmp.ne.s32.totalorder %s176, %s190
      %p192 = scmp.eq.s32.totalorder %s35, 0
      %p193 = por %p191, %p192
      %s195 = sadd.s32 %s194, 1
      %p198 = scmp.eq.s32.totalorder %s29, 1
      %p199 = scmp.ne.s32.totalorder %s194, %s196
      %p200 = scmp.eq.s32.totalorder %s29, 0
      %p201 = por %p199, %p200
      %p202 = scmp.ne.s32.totalorder %s194, %s196
      %p203 = scmp.eq.s32.totalorder %s34, 1
      %p204 = por %p202, %p203
      %p205 = scmp.ne.s32.totalorder %s196, %s197
      %p206 = scmp.eq.s32.totalorder %s34, 0
      %p207 = por %p205, %p206
      %p208 = scmp.ne.s32.totalorder %s196, %s197
      %p209 = scmp.eq.s32.totalorder %s35, 1
      %p210 = por %p208, %p209
      %p212 = scmp.ne.s32.totalorder %s197, %s211
      %p213 = scmp.eq.s32.totalorder %s35, 0
      %p214 = por %p212, %p213
      %s216 = sadd.s32 %s215, 1
      %p219 = scmp.eq.s32.totalorder %s29, 1
      %p220 = scmp.ne.s32.totalorder %s215, %s217
      %p221 = scmp.eq.s32.totalorder %s29, 0
      %p222 = por %p220, %p221
      %p223 = scmp.ne.s32.totalorder %s215, %s217
      %p224 = scmp.eq.s32.totalorder %s34, 1
      %p225 = por %p223, %p224
      %p226 = scmp.ne.s32.totalorder %s217, %s218
      %p227 = scmp.eq.s32.totalorder %s34, 0
      %p228 = por %p226, %p227
      %p229 = scmp.ne.s32.totalorder %s217, %s218
      %p230 = scmp.eq.s32.totalorder %s35, 1
      %p231 = por %p229, %p230
      %p233 = scmp.ne.s32.totalorder %s218, %s232
      %p234 = scmp.eq.s32.totalorder %s35, 0
      %p235 = por %p233, %p234
      %s237 = sadd.s32 %s236, 1
      %p240 = scmp.eq.s32.totalorder %s29, 1
      %p241 = scmp.ne.s32.totalorder %s236, %s238
      %p242 = scmp.eq.s32.totalorder %s29, 0
      %p243 = por %p241, %p242
      %p244 = scmp.ne.s32.totalorder %s236, %s238
      %p245 = scmp.eq.s32.totalorder %s34, 1
      %p246 = por %p244, %p245
      %p247 = scmp.ne.s32.totalorder %s238, %s239
      %p248 = scmp.eq.s32.totalorder %s34, 0
      %p249 = por %p247, %p248
      %p250 = scmp.ne.s32.totalorder %s238, %s239
      %p251 = scmp.eq.s32.totalorder %s35, 1
      %p252 = por %p250, %p251
      %p254 = scmp.ne.s32.totalorder %s239, %s253
      %p255 = scmp.eq.s32.totalorder %s35, 0
      %p256 = por %p254, %p255
      %s258 = sadd.s32 %s257, 1
      %p261 = scmp.eq.s32.totalorder %s29, 1
      %p262 = scmp.ne.s32.totalorder %s257, %s259
      %p263 = scmp.eq.s32.totalorder %s29, 0
      %p264 = por %p262, %p263
      %p265 = scmp.ne.s32.totalorder %s257, %s259
      %p266 = scmp.eq.s32.totalorder %s34, 1
      %p267 = por %p265, %p266
      %p268 = scmp.ne.s32.totalorder %s259, %s260
      %p269 = scmp.eq.s32.totalorder %s34, 0
      %p270 = por %p268, %p269
      %p271 = scmp.ne.s32.totalorder %s259, %s260
      %p272 = scmp.eq.s32.totalorder %s35, 1
      %p273 = por %p271, %p272
      %p275 = scmp.ne.s32.totalorder %s260, %s274
      %p276 = scmp.eq.s32.totalorder %s35, 0
      %p277 = por %p275, %p276
      %s279 = sadd.s32 %s278, 1
      %p282 = scmp.eq.s32.totalorder %s29, 1
      %p283 = scmp.ne.s32.totalorder %s278, %s280
      %p284 = scmp.eq.s32.totalorder %s29, 0
      %p285 = por %p283, %p284
      %p286 = scmp.ne.s32.totalorder %s278, %s280
      %p287 = scmp.eq.s32.totalorder %s34, 1
      %p288 = por %p286, %p287
      %p289 = scmp.ne.s32.totalorder %s280, %s281
      %p290 = scmp.eq.s32.totalorder %s34, 0
      %p291 = por %p289, %p290
      %p292 = scmp.ne.s32.totalorder %s280, %s281
      %p293 = scmp.eq.s32.totalorder %s35, 1
      %p294 = por %p292, %p293
      %p296 = scmp.ne.s32.totalorder %s281, %s295
      %p297 = scmp.eq.s32.totalorder %s35, 0
      %p298 = por %p296, %p297
      %s300 = sadd.s32 %s299, 1
      %p303 = scmp.eq.s32.totalorder %s29, 1
      %p304 = scmp.ne.s32.totalorder %s299, %s301
      %p305 = scmp.eq.s32.totalorder %s29, 0
      %p306 = por %p304, %p305
      %p307 = scmp.ne.s32.totalorder %s299, %s301
      %p308 = scmp.eq.s32.totalorder %s34, 1
      %p309 = por %p307, %p308
      %p310 = scmp.ne.s32.totalorder %s301, %s302
      %p311 = scmp.eq.s32.totalorder %s34, 0
      %p312 = por %p310, %p311
      %p313 = scmp.ne.s32.totalorder %s301, %s302
      %p314 = scmp.eq.s32.totalorder %s35, 1
      %p315 = por %p313, %p314
      %p317 = scmp.ne.s32.totalorder %s302, %s316
      %p318 = scmp.eq.s32.totalorder %s35, 0
      %p319 = por %p317, %p318
      %s321 = sadd.s32 %s320, 1
      %p324 = scmp.eq.s32.totalorder %s29, 1
      %p325 = scmp.ne.s32.totalorder %s320, %s322
      %p326 = scmp.eq.s32.totalorder %s29, 0
      %p327 = por %p325, %p326
      %p328 = scmp.ne.s32.totalorder %s320, %s322
      %p329 = scmp.eq.s32.totalorder %s34, 1
      %p330 = por %p328, %p329
      %p331 = scmp.ne.s32.totalorder %s322, %s323
      %p332 = scmp.eq.s32.totalorder %s34, 0
      %p333 = por %p331, %p332
      %p334 = scmp.ne.s32.totalorder %s322, %s323
      %p335 = scmp.eq.s32.totalorder %s35, 1
      %p336 = por %p334, %p335
      %p338 = scmp.ne.s32.totalorder %s323, %s337
      %p339 = scmp.eq.s32.totalorder %s35, 0
      %p340 = por %p338, %p339
      %s342 = sadd.s32 %s341, 1
      %p345 = scmp.eq.s32.totalorder %s29, 1
      %p346 = scmp.ne.s32.totalorder %s341, %s343
      %p347 = scmp.eq.s32.totalorder %s29, 0
      %p348 = por %p346, %p347
      %p349 = scmp.ne.s32.totalorder %s341, %s343
      %p350 = scmp.eq.s32.totalorder %s34, 1
      %p351 = por %p349, %p350
      %p352 = scmp.ne.s32.totalorder %s343, %s344
      %p353 = scmp.eq.s32.totalorder %s34, 0
      %p354 = por %p352, %p353
      %p355 = scmp.ne.s32.totalorder %s343, %s344
      %p356 = scmp.eq.s32.totalorder %s35, 1
      %p357 = por %p355, %p356
      %p359 = scmp.ne.s32.totalorder %s344, %s358
      %p360 = scmp.eq.s32.totalorder %s35, 0
      %p361 = por %p359, %p360
      %s363 = sadd.s32 %s362, 1
      %p366 = scmp.eq.s32.totalorder %s29, 1
      %p367 = scmp.ne.s32.totalorder %s362, %s364
      %p368 = scmp.eq.s32.totalorder %s29, 0
      %p369 = por %p367, %p368
      %p370 = scmp.ne.s32.totalorder %s362, %s364
      %p371 = scmp.eq.s32.totalorder %s34, 1
      %p372 = por %p370, %p371
      %p373 = scmp.ne.s32.totalorder %s364, %s365
      %p374 = scmp.eq.s32.totalorder %s34, 0
      %p375 = por %p373, %p374
      %p376 = scmp.ne.s32.totalorder %s364, %s365
      %p377 = scmp.eq.s32.totalorder %s35, 1
      %p378 = por %p376, %p377
      %p380 = scmp.ne.s32.totalorder %s365, %s379
      %p381 = scmp.eq.s32.totalorder %s35, 0
      %p382 = por %p380, %p381
      %s384 = sadd.s32 %s383, 1
      %p387 = scmp.eq.s32.totalorder %s29, 1
      %p388 = scmp.ne.s32.totalorder %s383, %s385
      %p389 = scmp.eq.s32.totalorder %s29, 0
      %p390 = por %p388, %p389
      %p391 = scmp.ne.s32.totalorder %s383, %s385
      %p392 = scmp.eq.s32.totalorder %s34, 1
      %p393 = por %p391, %p392
      %p394 = scmp.ne.s32.totalorder %s385, %s386
      %p395 = scmp.eq.s32.totalorder %s34, 0
      %p396 = por %p394, %p395
      %p397 = scmp.ne.s32.totalorder %s385, %s386
      %p398 = scmp.eq.s32.totalorder %s35, 1
      %p399 = por %p397, %p398
      %p401 = scmp.ne.s32.totalorder %s386, %s400
      %p402 = scmp.eq.s32.totalorder %s35, 0
      %p403 = por %p401, %p402
      %s405 = sadd.s32 %s404, 1
      %p408 = scmp.eq.s32.totalorder %s29, 1
      %p409 = scmp.ne.s32.totalorder %s404, %s406
      %p410 = scmp.eq.s32.totalorder %s29, 0
      %p411 = por %p409, %p410
      %p412 = scmp.ne.s32.totalorder %s404, %s406
      %p413 = scmp.eq.s32.totalorder %s34, 1
      %p414 = por %p412, %p413
      %p415 = scmp.ne.s32.totalorder %s406, %s407
      %p416 = scmp.eq.s32.totalorder %s34, 0
      %p417 = por %p415, %p416
      %p418 = scmp.ne.s32.totalorder %s406, %s407
      %p419 = scmp.eq.s32.totalorder %s35, 1
      %p420 = por %p418, %p419
      %p422 = scmp.ne.s32.totalorder %s407, %s421
      %p423 = scmp.eq.s32.totalorder %s35, 0
      %p424 = por %p422, %p423
      %s426 = sadd.s32 %s425, 1
      %p429 = scmp.eq.s32.totalorder %s29, 1
      %p430 = scmp.ne.s32.totalorder %s425, %s427
      %p431 = scmp.eq.s32.totalorder %s29, 0
      %p432 = por %p430, %p431
      %p433 = scmp.ne.s32.totalorder %s425, %s427
      %p434 = scmp.eq.s32.totalorder %s34, 1
      %p435 = por %p433, %p434
      %p436 = scmp.ne.s32.totalorder %s427, %s428
      %p437 = scmp.eq.s32.totalorder %s34, 0
      %p438 = por %p436, %p437
      %p439 = scmp.ne.s32.totalorder %s427, %s428
      %p440 = scmp.eq.s32.totalorder %s35, 1
      %p441 = por %p439, %p440
      %p443 = scmp.ne.s32.totalorder %s428, %s442
      %p444 = scmp.eq.s32.totalorder %s35, 0
      %p445 = por %p443, %p444
      %s447 = sadd.s32 %s446, 1
      %p450 = scmp.eq.s32.totalorder %s29, 1
      %p451 = scmp.ne.s32.totalorder %s446, %s448
      %p452 = scmp.eq.s32.totalorder %s29, 0
      %p453 = por %p451, %p452
      %p454 = scmp.ne.s32.totalorder %s446, %s448
      %p455 = scmp.eq.s32.totalorder %s34, 1
      %p456 = por %p454, %p455
      %p457 = scmp.ne.s32.totalorder %s448, %s449
      %p458 = scmp.eq.s32.totalorder %s34, 0
      %p459 = por %p457, %p458
      %p460 = scmp.ne.s32.totalorder %s448, %s449
      %p461 = scmp.eq.s32.totalorder %s35, 1
      %p462 = por %p460, %p461
      %p464 = scmp.ne.s32.totalorder %s449, %s463
      %p465 = scmp.eq.s32.totalorder %s35, 0
      %p466 = por %p464, %p465
      %s467 = ssub.s32 %s29, %s36
      %p468 = scmp.eq.s32.totalorder %s467, 0
      %s470 = sadd.s32 %s469, 1
      %s471 = scalar_select %p468, %s469, %s470
      %p474 = pneg %p468
      %p475 = scmp.eq.s32.totalorder %s29, 1
      %p476 = por %p474, %p475
      %p477 = scmp.ne.s32.totalorder %s469, %s472
      %p478 = scmp.eq.s32.totalorder %s29, 0
      %p479 = por %p477, %p478
      %p480 = scmp.ne.s32.totalorder %s469, %s472
      %p481 = scmp.eq.s32.totalorder %s34, 1
      %p482 = por %p480, %p481
      %p483 = scmp.ne.s32.totalorder %s472, %s473
      %p484 = scmp.eq.s32.totalorder %s34, 0
      %p485 = por %p483, %p484
      %p486 = scmp.ne.s32.totalorder %s472, %s473
      %p487 = scmp.eq.s32.totalorder %s35, 1
      %p488 = por %p486, %p487
      %p490 = scmp.ne.s32.totalorder %s473, %s489
      %p491 = scmp.eq.s32.totalorder %s35, 0
      %p492 = por %p490, %p491
      %p493 = scmp.le.s32.totalorder 1, %s29
      %p494 = scmp.lt.s32.totalorder %s29, 3
      %p495 = pnand %p493, %p494
      %p496 = pneg %p495
      // Predicated region
      $region9: #{sentiment_classifier_forward.1} parent=5 // pred_check
        _
      $region10: #{sentiment_classifier_forward.1} parent=5 // pred_check_branch
        %498 = sbr.rel (%p495) target = $region12
      $region11: #{sentiment_classifier_forward.1} parent=5 // pred_region
        %s499 = ssub.s32 %s29, 1
        // Predicated region
        $region13: #{sentiment_classifier_forward.1} parent=11 // pred_check
          %p500 = pneg %p102
        $region14: #{sentiment_classifier_forward.1} parent=11 // pred_check_branch
          %502 = sbr.rel (%p500) target = $region16
        $region15: #{sentiment_classifier_forward.1} parent=11 // pred_region
          _
        $region16: #{sentiment_classifier_forward.1} parent=11 // pred_fallthru
          _
        // Predicated region
        $region17: #{sentiment_classifier_forward.1} parent=11 // pred_check
          %p503 = pneg %p123
        $region18: #{sentiment_classifier_forward.1} parent=11 // pred_check_branch
          %505 = sbr.rel (%p503) target = $region20
        $region19: #{sentiment_classifier_forward.1} parent=11 // pred_region
          _
        $region20: #{sentiment_classifier_forward.1} parent=11 // pred_fallthru
          _
        // Predicated region
        $region21: #{sentiment_classifier_forward.1} parent=11 // pred_check
          %p506 = pneg %p144
        $region22: #{sentiment_classifier_forward.1} parent=11 // pred_check_branch
          %508 = sbr.rel (%p506) target = $region24
        $region23: #{sentiment_classifier_forward.1} parent=11 // pred_region
          _
        $region24: #{sentiment_classifier_forward.1} parent=11 // pred_fallthru
          _
        // Predicated region
        $region25: #{sentiment_classifier_forward.1} parent=11 // pred_check
          %p509 = pneg %p165
        $region26: #{sentiment_classifier_forward.1} parent=11 // pred_check_branch
          %511 = sbr.rel (%p509) target = $region28
        $region27: #{sentiment_classifier_forward.1} parent=11 // pred_region
          _
        $region28: #{sentiment_classifier_forward.1} parent=11 // pred_fallthru
          _
        // Predicated region
        $region29: #{sentiment_classifier_forward.1} parent=11 // pred_check
          %p512 = pneg %p186
        $region30: #{sentiment_classifier_forward.1} parent=11 // pred_check_branch
          %514 = sbr.rel (%p512) target = $region32
        $region31: #{sentiment_classifier_forward.1} parent=11 // pred_region
          _
        $region32: #{sentiment_classifier_forward.1} parent=11 // pred_fallthru
          _
        // Predicated region
        $region33: #{sentiment_classifier_forward.1} parent=11 // pred_check
          %p515 = pneg %p207
        $region34: #{sentiment_classifier_forward.1} parent=11 // pred_check_branch
          %517 = sbr.rel (%p515) target = $region36
        $region35: #{sentiment_classifier_forward.1} parent=11 // pred_region
          _
        $region36: #{sentiment_classifier_forward.1} parent=11 // pred_fallthru
          _
        // Predicated region
        $region37: #{sentiment_classifier_forward.1} parent=11 // pred_check
          %p518 = pneg %p228
        $region38: #{sentiment_classifier_forward.1} parent=11 // pred_check_branch
          %520 = sbr.rel (%p518) target = $region40
        $region39: #{sentiment_classifier_forward.1} parent=11 // pred_region
          _
        $region40: #{sentiment_classifier_forward.1} parent=11 // pred_fallthru
          _
        // Predicated region
        $region41: #{sentiment_classifier_forward.1} parent=11 // pred_check
          %p521 = pneg %p249
        $region42: #{sentiment_classifier_forward.1} parent=11 // pred_check_branch
          %523 = sbr.rel (%p521) target = $region44
        $region43: #{sentiment_classifier_forward.1} parent=11 // pred_region
          _
        $region44: #{sentiment_classifier_forward.1} parent=11 // pred_fallthru
          _
        // Predicated region
        $region45: #{sentiment_classifier_forward.1} parent=11 // pred_check
          %p524 = pneg %p270
        $region46: #{sentiment_classifier_forward.1} parent=11 // pred_check_branch
          %526 = sbr.rel (%p524) target = $region48
        $region47: #{sentiment_classifier_forward.1} parent=11 // pred_region
          _
        $region48: #{sentiment_classifier_forward.1} parent=11 // pred_fallthru
          _
        // Predicated region
        $region49: #{sentiment_classifier_forward.1} parent=11 // pred_check
          %p527 = pneg %p291
        $region50: #{sentiment_classifier_forward.1} parent=11 // pred_check_branch
          %529 = sbr.rel (%p527) target = $region52
        $region51: #{sentiment_classifier_forward.1} parent=11 // pred_region
          _
        $region52: #{sentiment_classifier_forward.1} parent=11 // pred_fallthru
          _
        // Predicated region
        $region53: #{sentiment_classifier_forward.1} parent=11 // pred_check
          %p530 = pneg %p312
        $region54: #{sentiment_classifier_forward.1} parent=11 // pred_check_branch
          %532 = sbr.rel (%p530) target = $region56
        $region55: #{sentiment_classifier_forward.1} parent=11 // pred_region
          _
        $region56: #{sentiment_classifier_forward.1} parent=11 // pred_fallthru
          _
        // Predicated region
        $region57: #{sentiment_classifier_forward.1} parent=11 // pred_check
          %p533 = pneg %p333
        $region58: #{sentiment_classifier_forward.1} parent=11 // pred_check_branch
          %535 = sbr.rel (%p533) target = $region60
        $region59: #{sentiment_classifier_forward.1} parent=11 // pred_region
          _
        $region60: #{sentiment_classifier_forward.1} parent=11 // pred_fallthru
          _
        // Predicated region
        $region61: #{sentiment_classifier_forward.1} parent=11 // pred_check
          %p536 = pneg %p354
        $region62: #{sentiment_classifier_forward.1} parent=11 // pred_check_branch
          %538 = sbr.rel (%p536) target = $region64
        $region63: #{sentiment_classifier_forward.1} parent=11 // pred_region
          _
        $region64: #{sentiment_classifier_forward.1} parent=11 // pred_fallthru
          _
        // Predicated region
        $region65: #{sentiment_classifier_forward.1} parent=11 // pred_check
          %p539 = pneg %p375
        $region66: #{sentiment_classifier_forward.1} parent=11 // pred_check_branch
          %541 = sbr.rel (%p539) target = $region68
        $region67: #{sentiment_classifier_forward.1} parent=11 // pred_region
          _
        $region68: #{sentiment_classifier_forward.1} parent=11 // pred_fallthru
          _
        // Predicated region
        $region69: #{sentiment_classifier_forward.1} parent=11 // pred_check
          %p542 = pneg %p396
        $region70: #{sentiment_classifier_forward.1} parent=11 // pred_check_branch
          %544 = sbr.rel (%p542) target = $region72
        $region71: #{sentiment_classifier_forward.1} parent=11 // pred_region
          _
        $region72: #{sentiment_classifier_forward.1} parent=11 // pred_fallthru
          _
        // Predicated region
        $region73: #{sentiment_classifier_forward.1} parent=11 // pred_check
          %p545 = pneg %p417
        $region74: #{sentiment_classifier_forward.1} parent=11 // pred_check_branch
          %547 = sbr.rel (%p545) target = $region76
        $region75: #{sentiment_classifier_forward.1} parent=11 // pred_region
          _
        $region76: #{sentiment_classifier_forward.1} parent=11 // pred_fallthru
          _
        // Predicated region
        $region77: #{sentiment_classifier_forward.1} parent=11 // pred_check
          %p548 = pneg %p438
        $region78: #{sentiment_classifier_forward.1} parent=11 // pred_check_branch
          %550 = sbr.rel (%p548) target = $region80
        $region79: #{sentiment_classifier_forward.1} parent=11 // pred_region
          _
        $region80: #{sentiment_classifier_forward.1} parent=11 // pred_fallthru
          _
        // Predicated region
        $region81: #{sentiment_classifier_forward.1} parent=11 // pred_check
          %p551 = pneg %p459
        $region82: #{sentiment_classifier_forward.1} parent=11 // pred_check_branch
          %553 = sbr.rel (%p551) target = $region84
        $region83: #{sentiment_classifier_forward.1} parent=11 // pred_region
          _
        $region84: #{sentiment_classifier_forward.1} parent=11 // pred_fallthru
          _
      $region12: #{sentiment_classifier_forward.1} parent=5 // pred_fallthru
        _
      %p554 = scmp.lt.s32.totalorder %s29, 2
      // Predicated region
      $region85: #{sentiment_classifier_forward.1} parent=5 // pred_check
        %p555 = pneg %p554
      $region86: #{sentiment_classifier_forward.1} parent=5 // pred_check_branch
        %557 = sbr.rel (%p555) target = $region88
      $region87: #{sentiment_classifier_forward.1} parent=5 // pred_region
        // Predicated region
        $region89: #{sentiment_classifier_forward.1} parent=87 // pred_check
          %p558 = pneg %p49
        $region90: #{sentiment_classifier_forward.1} parent=87 // pred_check_branch
          %560 = sbr.rel (%p558) target = $region92
        $region91: #{sentiment_classifier_forward.1} parent=87 // pred_region
          %p561 = scmp.lt.s32.totalorder %s29, 1
          %s562 = scalar_select %p561, %s29, 1
          %s563 = smul.addr %s562, 8
          %s564 = scalar_lea.vmem %s0, %s563
        $region92: #{sentiment_classifier_forward.1} parent=87 // pred_fallthru
          _
        // Predicated region
        $region93: #{sentiment_classifier_forward.1} parent=87 // pred_check
          %p565 = pneg %p75
        $region94: #{sentiment_classifier_forward.1} parent=87 // pred_check_branch
          %567 = sbr.rel (%p565) target = $region96
        $region95: #{sentiment_classifier_forward.1} parent=87 // pred_region
          %p568 = scmp.lt.s32.totalorder %s29, 1
          %s569 = scalar_select %p568, %s29, 1
          %s570 = scalar_lea.vmem %s1, %s569
        $region96: #{sentiment_classifier_forward.1} parent=87 // pred_fallthru
          _
      $region88: #{sentiment_classifier_forward.1} parent=5 // pred_fallthru
        _
      %p571 = scmp.le.s32.totalorder 1, %s29
      %p572 = scmp.lt.s32.totalorder %s29, 3
      %p573 = pnand %p571, %p572
      %p574 = pneg %p573
      // Predicated region
      $region97: #{sentiment_classifier_forward.1} parent=5 // pred_check
        _
      $region98: #{sentiment_classifier_forward.1} parent=5 // pred_check_branch
        %576 = sbr.rel (%p573) target = $region100
      $region99: #{sentiment_classifier_forward.1} parent=5 // pred_region
        %s577 = ssub.s32 %s29, 1
        %p578 = scmp.lt.s32.totalorder %s34, 1
        %s579 = scalar_select %p578, %s34, 1
        %s580 = smul.addr %s579, 8
        %s581 = scalar_lea.vmem %s0, %s580
        %p582 = pneg %p55
        %p583 = pneg %p52
        %p584 = scmp.lt.s32.totalorder %s34, 1
        %s585 = scalar_select %p584, %s34, 1
        %s586 = scalar_lea.vmem %s1, %s585
        %p587 = pneg %p81
        %p588 = pneg %p78
        %p589 = pneg %p102
        %p590 = pneg %p99
        %p591 = pneg %p123
        %p592 = pneg %p120
        %p593 = pneg %p144
        %p594 = pneg %p141
        %p595 = pneg %p165
        %p596 = pneg %p162
        %p597 = pneg %p186
        %p598 = pneg %p183
        %p599 = pneg %p207
        %p600 = pneg %p204
        %p601 = pneg %p228
        %p602 = pneg %p225
        %p603 = pneg %p249
        %p604 = pneg %p246
        %p605 = pneg %p270
        %p606 = pneg %p267
        %p607 = pneg %p291
        %p608 = pneg %p288
        %p609 = pneg %p312
        %p610 = pneg %p309
        %p611 = pneg %p333
        %p612 = pneg %p330
        %p613 = pneg %p354
        %p614 = pneg %p351
        %p615 = pneg %p375
        %p616 = pneg %p372
        %p617 = pneg %p396
        %p618 = pneg %p393
        %p619 = pneg %p417
        %p620 = pneg %p414
        %p621 = pneg %p438
        %p622 = pneg %p435
        %p623 = pneg %p459
        %p624 = pneg %p456
        %p625 = pneg %p485
        %p626 = pneg %p482
        %s627 = sand.u32 %s472, 1
        %s628 = scalar_lea.sflag [#allocation3], %s627
        %s629 = sand.u32 %s472, 1
        %s630 = scalar_lea.vmem [#allocation2], %s629
        %p631 = scmp.lt.s32.totalorder %s34, 1
        %s632 = scalar_select %p631, %s34, 1
        %s633 = smul.addr %s632, 8
        %s634 = scalar_lea.vmem %s0, %s633
        %p635 = scmp.lt.s32.totalorder %s34, 1
        %s636 = scalar_select %p635, %s34, 1
        %s637 = scalar_lea.vmem %s1, %s636
        %v639 = vld [vmem:[%s634] sm:$0xff]
        %v640 = vld [vmem:[%s637] sm:$0x1]
        %v641 = vld [vmem:[%s2] sm:$0x1]
        %v642 = vld [vmem:[%s3] sm:$0x1]
        %vm643 = vcmask 261120
        %v644 = vsel %vm643, %v639, 0.0
        %645 = vadd.xlane.f32.xlu0 %v644
        %v646 = vpop.xlane.xlu0 %645
        %v647 = vrcp.pop 32.0
        %v648 = vmul.f32 32.0, %v647
        %v649 = vsub.f32 1.0, %v648
        %v650 = vmul.f32 %v647, %v649
        %v651 = vadd.f32 %v647, %v650
        %vm652 = vweird.f32 %v647
        %v653 = vsel %vm652, %v647, %v651
        %v654 = vmul.f32 %v646, %v653
        %v655 = vsub.f32 %v639, %v654
        %v656 = vmul.f32 %v655, %v655
        %v657 = vsel %vm643, %v656, 0.0
        %658 = vadd.xlane.f32.xlu0 %v657
        %v659 = vpop.xlane.xlu0 %658
        %v660 = vmul.f32 %v659, %v653
        %v661 = vadd.f32 %v660, 1e-12
        %v662 = vrsqrt.pop %v661
        %v663 = vmul.f32 %v662, %v661
        %v664 = vmul.f32 %v663, %v662
        %v665 = vmul.f32 0.5, %v664
        %v666 = vsub.f32 1.5, %v665
        %v667 = vmul.f32 %v662, %v666
        %vm668 = vweird.f32 %v661
        %vm669 = vweird.f32 %v662
        %vm670 = vmor %vm668, %vm669
        %v671 = vsel %vm670, %v662, %v667
        %v672 = vmul.f32 %v655, %v671
        %v674 = vperm.slane %v641, 0
        %v676 = vmul.f32 %v672, %v674
        %v678 = vperm.slane %v642, 0
        %v680 = vadd.f32 %v676, %v678
        %v681 = vld [vmem:[%s4] sm:$0xf]
        %v682 = vld [vmem:[%s4 + $0x4] sm:$0xf]
        %v683 = vld [vmem:[%s4 + $0x8] sm:$0xf]
        %v684 = vld [vmem:[%s4 + $0xc] sm:$0xf]
        %v685 = vpack.c.bf16 %v680, %v680
        %v686 = vld [vmem:[%s5] sm:$0x1]
        %v688 = vperm.slane %v686, 0
        %v694 = vunpack.c.l.b16 %v681
        %v695 = vunpack.c.l.b16 %v682
        %v696 = vunpack.c.l.b16 %v683
        %v697 = vunpack.c.l.b16 %v684
        %v698 = vpack.c.b16 %v695, %v694
        %v699 = vpack.c.b16 %v697, %v696
        %v703 = vsel %vm643, %v685, 0
        %705 = vmatpush.bf16.msra.mxu0 0
        %706 = vmatpush.bf16.msra.mxu0 0
        %707 = vmatpush.bf16.msra.mxu0 0
        %708 = vmatpush.bf16.msra.mxu0 0
        %709 = vmatpush.bf16.msra.mxu0 0
        %710 = vmatpush.bf16.msra.mxu0 0
        %711 = vmatpush.bf16.msra.mxu0 %v699
        %712 = vmatpush.bf16.msra.mxu0 %v698
        %713 = vmatmul.bf16.gmra.mxu0 %v703
        %v714 = vpop.f32.mrf.mxu0
        %v715 = vadd.f32 %v688, %v714
        %v716 = vpop.f32.mrf.mxu0
        %717 = vdwg.mxu0
        %v718 = vpack.c.bf16 %v715, %v715
        %720 = vrot.lane.b32.xlu0 %v718, 96
        %v721 = vpop.permute.xlu0 %720
        %vm722 = vcmask 64512
        %v724 = vsel %vm722, %v718, 0
        %v727 = vsel %vm722, %v721, 0
        %729 = vmatpush.bf16.xpose.msra.mxu0 0
        %730 = vmatpush.bf16.xpose.msra.mxu0 0
        %731 = vmatpush.bf16.xpose.msra.mxu0 0
        %732 = vmatpush.bf16.xpose.msra.mxu0 0
        %733 = vmatpush.bf16.xpose.msra.mxu0 0
        %734 = vmatpush.bf16.xpose.msra.mxu0 0
        %735 = vmatpush.bf16.xpose.msra.mxu0 0
        %736 = vmatpush.bf16.xpose.msra.mxu0 %v727
        %737 = vmatmul.bf16.gmra.mxu0 %v724
        %v738 = vpop.f32.mrf.mxu0
        %v739 = vadd.f32 0.0, %v738
        %v740 = vpop.f32.mrf.mxu0
        %741 = vdwg.mxu0
        %v742 = vmul.f32 %v739, 0.35355338
        %v744 = vperm.slane %v640, 0
        %v746 = vadd.f32 %v742, %v744
        %v747 = vsel %vm722, %v746, -inf
        %748 = vmax.xlane.f32.xlu0 %v747
        %v749 = vpop.xlane.xlu0 %748
        %v750 = vsub.f32 %v746, %v749
        %v751 = vmul.f32 %v750, 1.442695
        %v752 = vpow.pop %v751
        %v753 = vsel %vm722, %v752, 0.0
        %754 = vadd.xlane.f32.xlu0 %v753
        %v755 = vpop.xlane.xlu0 %754
        %v756 = vrcp.pop %v755
        %v757 = vmul.f32 %v752, %v756
        %v758 = vpack.c.bf16 %v757, %v757
        %759 = vrot.lane.b32.xlu0 %v718, 64
        %v760 = vpop.permute.xlu0 %759
        %v762 = vsel %vm722, %v758, 0
        %vm764 = vcmask 1043456
        %v766 = vsel %vm764, %v760, 0
        %768 = vmatpush.bf16.msra.mxu0 0
        %769 = vmatpush.bf16.msra.mxu0 0
        %770 = vmatpush.bf16.msra.mxu0 0
        %771 = vmatpush.bf16.msra.mxu0 0
        %772 = vmatpush.bf16.msra.mxu0 0
        %773 = vmatpush.bf16.msra.mxu0 0
        %774 = vmatpush.bf16.msra.mxu0 0
        %775 = vmatpush.bf16.msra.mxu0 %v766
        %776 = vmatmul.bf16.gmra.mxu0 %v762
        %v777 = vpop.f32.mrf.mxu0
        %v778 = vadd.f32 0.0, %v777
        %v779 = vpop.f32.mrf.mxu0
        %780 = vdwg.mxu0
        %781 = vrot.lane.b32.xlu0 %v718, 120
        %v782 = vpop.permute.xlu0 %781
        %783 = vrot.lane.b32.xlu0 %v718, 88
        %v784 = vpop.permute.xlu0 %783
        %v786 = vsel %vm722, %v782, 0
        %v789 = vsel %vm722, %v784, 0
        %791 = vmatpush.bf16.xpose.msra.mxu0 0
        %792 = vmatpush.bf16.xpose.msra.mxu0 0
        %793 = vmatpush.bf16.xpose.msra.mxu0 0
        %794 = vmatpush.bf16.xpose.msra.mxu0 0
        %795 = vmatpush.bf16.xpose.msra.mxu0 0
        %796 = vmatpush.bf16.xpose.msra.mxu0 0
        %797 = vmatpush.bf16.xpose.msra.mxu0 0
        %798 = vmatpush.bf16.xpose.msra.mxu0 %v789
        %799 = vmatmul.bf16.gmra.mxu0 %v786
        %v800 = vpop.f32.mrf.mxu0
        %v801 = vadd.f32 0.0, %v800
        %v802 = vpop.f32.mrf.mxu0
        %803 = vdwg.mxu0
        %v804 = vmul.f32 %v801, 0.35355338
        %v805 = vadd.f32 %v804, %v744
        %v806 = vsel %vm722, %v805, -inf
        %807 = vmax.xlane.f32.xlu0 %v806
        %v808 = vpop.xlane.xlu0 %807
        %v809 = vsub.f32 %v805, %v808
        %v810 = vmul.f32 %v809, 1.442695
        %v811 = vpow.pop %v810
        %v812 = vsel %vm722, %v811, 0.0
        %813 = vadd.xlane.f32.xlu0 %v812
        %v814 = vpop.xlane.xlu0 %813
        %v815 = vrcp.pop %v814
        %v816 = vmul.f32 %v811, %v815
        %v817 = vpack.c.bf16 %v816, %v816
        %818 = vrot.lane.b32.xlu0 %v718, 56
        %v819 = vpop.permute.xlu0 %818
        %v821 = vsel %vm722, %v817, 0
        %v824 = vsel %vm764, %v819, 0
        %826 = vmatpush.bf16.msra.mxu0 0
        %827 = vmatpush.bf16.msra.mxu0 0
        %828 = vmatpush.bf16.msra.mxu0 0
        %829 = vmatpush.bf16.msra.mxu0 0
        %830 = vmatpush.bf16.msra.mxu0 0
        %831 = vmatpush.bf16.msra.mxu0 0
        %832 = vmatpush.bf16.msra.mxu0 0
        %833 = vmatpush.bf16.msra.mxu0 %v824
        %834 = vmatmul.bf16.gmra.mxu0 %v821
        %v835 = vpop.f32.mrf.mxu0
        %v836 = vadd.f32 0.0, %v835
        %v837 = vpop.f32.mrf.mxu0
        %838 = vdwg.mxu0
        %839 = vrot.lane.b32.xlu0 %v718, 112
        %v840 = vpop.permute.xlu0 %839
        %841 = vrot.lane.b32.xlu0 %v718, 80
        %v842 = vpop.permute.xlu0 %841
        %v844 = vsel %vm722, %v840, 0
        %v847 = vsel %vm722, %v842, 0
        %849 = vmatpush.bf16.xpose.msra.mxu0 0
        %850 = vmatpush.bf16.xpose.msra.mxu0 0
        %851 = vmatpush.bf16.xpose.msra.mxu0 0
        %852 = vmatpush.bf16.xpose.msra.mxu0 0
        %853 = vmatpush.bf16.xpose.msra.mxu0 0
        %854 = vmatpush.bf16.xpose.msra.mxu0 0
        %855 = vmatpush.bf16.xpose.msra.mxu0 0
        %856 = vmatpush.bf16.xpose.msra.mxu0 %v847
        %857 = vmatmul.bf16.gmra.mxu0 %v844
        %v858 = vpop.f32.mrf.mxu0
        %v859 = vadd.f32 0.0, %v858
        %v860 = vpop.f32.mrf.mxu0
        %861 = vdwg.mxu0
        %v862 = vmul.f32 %v859, 0.35355338
        %v863 = vadd.f32 %v862, %v744
        %v864 = vsel %vm722, %v863, -inf
        %865 = vmax.xlane.f32.xlu0 %v864
        %v866 = vpop.xlane.xlu0 %865
        %v867 = vsub.f32 %v863, %v866
        %v868 = vmul.f32 %v867, 1.442695
        %v869 = vpow.pop %v868
        %v870 = vsel %vm722, %v869, 0.0
        %871 = vadd.xlane.f32.xlu0 %v870
        %v872 = vpop.xlane.xlu0 %871
        %v873 = vrcp.pop %v872
        %v874 = vmul.f32 %v869, %v873
        %v875 = vpack.c.bf16 %v874, %v874
        %876 = vrot.lane.b32.xlu0 %v718, 48
        %v877 = vpop.permute.xlu0 %876
        %v879 = vsel %vm722, %v875, 0
        %v882 = vsel %vm764, %v877, 0
        %884 = vmatpush.bf16.msra.mxu0 0
        %885 = vmatpush.bf16.msra.mxu0 0
        %886 = vmatpush.bf16.msra.mxu0 0
        %887 = vmatpush.bf16.msra.mxu0 0
        %888 = vmatpush.bf16.msra.mxu0 0
        %889 = vmatpush.bf16.msra.mxu0 0
        %890 = vmatpush.bf16.msra.mxu0 0
        %891 = vmatpush.bf16.msra.mxu0 %v882
        %892 = vmatmul.bf16.gmra.mxu0 %v879
        %v893 = vpop.f32.mrf.mxu0
        %v894 = vadd.f32 0.0, %v893
        %v895 = vpop.f32.mrf.mxu0
        %896 = vdwg.mxu0
        %897 = vrot.lane.b32.xlu0 %v718, 104
        %v898 = vpop.permute.xlu0 %897
        %899 = vrot.lane.b32.xlu0 %v718, 72
        %v900 = vpop.permute.xlu0 %899
        %v902 = vsel %vm722, %v898, 0
        %v905 = vsel %vm722, %v900, 0
        %907 = vmatpush.bf16.xpose.msra.mxu0 0
        %908 = vmatpush.bf16.xpose.msra.mxu0 0
        %909 = vmatpush.bf16.xpose.msra.mxu0 0
        %910 = vmatpush.bf16.xpose.msra.mxu0 0
        %911 = vmatpush.bf16.xpose.msra.mxu0 0
        %912 = vmatpush.bf16.xpose.msra.mxu0 0
        %913 = vmatpush.bf16.xpose.msra.mxu0 0
        %914 = vmatpush.bf16.xpose.msra.mxu0 %v905
        %915 = vmatmul.bf16.gmra.mxu0 %v902
        %v916 = vpop.f32.mrf.mxu0
        %v917 = vadd.f32 0.0, %v916
        %v918 = vpop.f32.mrf.mxu0
        %919 = vdwg.mxu0
        %v920 = vmul.f32 %v917, 0.35355338
        %v921 = vadd.f32 %v920, %v744
        %v922 = vsel %vm722, %v921, -inf
        %923 = vmax.xlane.f32.xlu0 %v922
        %v924 = vpop.xlane.xlu0 %923
        %v925 = vsub.f32 %v921, %v924
        %v926 = vmul.f32 %v925, 1.442695
        %v927 = vpow.pop %v926
        %v928 = vsel %vm722, %v927, 0.0
        %929 = vadd.xlane.f32.xlu0 %v928
        %v930 = vpop.xlane.xlu0 %929
        %v931 = vrcp.pop %v930
        %v932 = vmul.f32 %v927, %v931
        %v933 = vpack.c.bf16 %v932, %v932
        %934 = vrot.lane.b32.xlu0 %v718, 40
        %v935 = vpop.permute.xlu0 %934
        %v937 = vsel %vm722, %v933, 0
        %v940 = vsel %vm764, %v935, 0
        %942 = vmatpush.bf16.msra.mxu0 0
        %943 = vmatpush.bf16.msra.mxu0 0
        %944 = vmatpush.bf16.msra.mxu0 0
        %945 = vmatpush.bf16.msra.mxu0 0
        %946 = vmatpush.bf16.msra.mxu0 0
        %947 = vmatpush.bf16.msra.mxu0 0
        %948 = vmatpush.bf16.msra.mxu0 0
        %949 = vmatpush.bf16.msra.mxu0 %v940
        %950 = vmatmul.bf16.gmra.mxu0 %v937
        %v951 = vpop.f32.mrf.mxu0
        %v952 = vadd.f32 0.0, %v951
        %v953 = vpop.f32.mrf.mxu0
        %954 = vdwg.mxu0
        %956 = vrot.lane.b32.xlu0 %v836, 8
        %v957 = vpop.permute.xlu0 %956
        %960 = vrot.lane.b32.xlu0 %v894, 16
        %v961 = vpop.permute.xlu0 %960
        %964 = vrot.lane.b32.xlu0 %v952, 24
        %v965 = vpop.permute.xlu0 %964
        %v967 = vsel %vm722, %v778, %v957
        %vm968 = vcmask 130048
        %v969 = vsel %vm968, %v967, %v961
        %vm970 = vcmask 195584
        %v971 = vsel %vm970, %v969, %v965
        %v972 = vld [vmem:[%s6] sm:$0xf]
        %v973 = vld [vmem:[%s6 + $0x4] sm:$0xf]
        %v974 = vld [vmem:[%s6 + $0x8] sm:$0xf]
        %v975 = vld [vmem:[%s6 + $0xc] sm:$0xf]
        %v976 = vpack.c.bf16 %v971, %v971
        %v977 = vld [vmem:[%s7] sm:$0x1]
        %v979 = vperm.slane %v977, 0
        %v985 = vunpack.c.l.b16 %v972
        %v986 = vunpack.c.l.b16 %v973
        %v987 = vunpack.c.l.b16 %v974
        %v988 = vunpack.c.l.b16 %v975
        %v989 = vpack.c.b16 %v986, %v985
        %v990 = vpack.c.b16 %v988, %v987
        %v994 = vsel %vm643, %v976, 0
        %996 = vmatpush.bf16.msra.mxu0 0
        %997 = vmatpush.bf16.msra.mxu0 0
        %998 = vmatpush.bf16.msra.mxu0 0
        %999 = vmatpush.bf16.msra.mxu0 0
        %1000 = vmatpush.bf16.msra.mxu0 0
        %1001 = vmatpush.bf16.msra.mxu0 0
        %1002 = vmatpush.bf16.msra.mxu0 %v990
        %1003 = vmatpush.bf16.msra.mxu0 %v989
        %1004 = vmatmul.bf16.gmra.mxu0 %v994
        %v1005 = vpop.f32.mrf.mxu0
        %v1006 = vadd.f32 %v979, %v1005
        %v1007 = vpop.f32.mrf.mxu0
        %1008 = vdwg.mxu0
        %v1009 = vadd.f32 %v1006, %v680
        %v1010 = vld [vmem:[%s8] sm:$0x1]
        %v1011 = vld [vmem:[%s9] sm:$0x1]
        %v1012 = vsel %vm643, %v1009, 0.0
        %1013 = vadd.xlane.f32.xlu0 %v1012
        %v1014 = vpop.xlane.xlu0 %1013
        %v1015 = vmul.f32 %v1014, %v653
        %v1016 = vsub.f32 %v1009, %v1015
        %v1017 = vmul.f32 %v1016, %v1016
        %v1018 = vsel %vm643, %v1017, 0.0
        %1019 = vadd.xlane.f32.xlu0 %v1018
        %v1020 = vpop.xlane.xlu0 %1019
        %v1021 = vmul.f32 %v1020, %v653
        %v1022 = vadd.f32 %v1021, 1e-12
        %v1023 = vrsqrt.pop %v1022
        %v1024 = vmul.f32 %v1023, %v1022
        %v1025 = vmul.f32 %v1024, %v1023
        %v1026 = vmul.f32 0.5, %v1025
        %v1027 = vsub.f32 1.5, %v1026
        %v1028 = vmul.f32 %v1023, %v1027
        %vm1029 = vweird.f32 %v1022
        %vm1030 = vweird.f32 %v1023
        %vm1031 = vmor %vm1029, %vm1030
        %v1032 = vsel %vm1031, %v1023, %v1028
        %v1033 = vmul.f32 %v1016, %v1032
        %v1035 = vperm.slane %v1010, 0
        %v1037 = vmul.f32 %v1033, %v1035
        %v1039 = vperm.slane %v1011, 0
        %v1041 = vadd.f32 %v1037, %v1039
        %v1042 = vld [vmem:[%s10] sm:$0xf]
        %v1043 = vld [vmem:[%s10 + $0x4] sm:$0xf]
        %v1044 = vld [vmem:[%s10 + $0x8] sm:$0xf]
        %v1045 = vld [vmem:[%s10 + $0xc] sm:$0xf]
        %v1046 = vpack.c.bf16 %v1041, %v1041
        %v1047 = vld [vmem:[%s11] sm:$0x1]
        %v1049 = vperm.slane %v1047, 0
        %v1055 = vunpack.c.l.b16 %v1042
        %v1056 = vunpack.c.l.b16 %v1043
        %v1057 = vunpack.c.l.b16 %v1044
        %v1058 = vunpack.c.l.b16 %v1045
        %v1059 = vpack.c.b16 %v1056, %v1055
        %v1060 = vpack.c.b16 %v1058, %v1057
        %v1064 = vsel %vm643, %v1046, 0
        %1066 = vmatpush.bf16.msra.mxu0 0
        %1067 = vmatpush.bf16.msra.mxu0 0
        %1068 = vmatpush.bf16.msra.mxu0 0
        %1069 = vmatpush.bf16.msra.mxu0 0
        %1070 = vmatpush.bf16.msra.mxu0 0
        %1071 = vmatpush.bf16.msra.mxu0 0
        %1072 = vmatpush.bf16.msra.mxu0 %v1060
        %1073 = vmatpush.bf16.msra.mxu0 %v1059
        %1074 = vmatmul.bf16.gmra.mxu0 %v1064
        %v1075 = vpop.f32.mrf.mxu0
        %v1076 = vadd.f32 %v1049, %v1075
        %v1077 = vpop.f32.mrf.mxu0
        %1078 = vdwg.mxu0
        %v1079 = vmul.f32 %v1076, 0.5
        %v1080 = vmul.f32 %v1076, 0.70710677
        %v1081 = vmul.f32 %v1080, %v1080
        %v1082 = vmin.f32 16.0, %v1081
        %v1083 = vmul.f32 %v1082, 2.1237322e-06
        %v1084 = vadd.f32 %v1083, 0.00028619796
        %v1085 = vmul.f32 %v1082, %v1084
        %v1086 = vadd.f32 %v1085, 0.0036580483
        %v1087 = vmul.f32 %v1082, %v1086
        %v1088 = vadd.f32 %v1087, 0.05243302
        %v1089 = vmul.f32 %v1082, %v1088
        %v1090 = vadd.f32 %v1089, 0.18741608
        %v1091 = vmul.f32 %v1082, %v1090
        %v1092 = vadd.f32 %v1091, 1.1283791
        %v1093 = vmul.f32 %v1080, %v1092
        %v1094 = vmul.f32 %v1082, 3.8918573e-05
        %v1095 = vadd.f32 %v1094, 0.001143296
        %v1096 = vmul.f32 %v1082, %v1095
        %v1097 = vadd.f32 %v1096, 0.014752088
        %v1098 = vmul.f32 %v1082, %v1097
        %v1099 = vadd.f32 %v1098, 0.112945676
        %v1100 = vmul.f32 %v1082, %v1099
        %v1101 = vadd.f32 %v1100, 0.4994258
        %v1102 = vmul.f32 %v1082, %v1101
        %v1103 = vadd.f32 %v1102, 1.0
        %v1104 = vrcp.pop %v1103
        %v1105 = vmul.f32 %v1103, %v1104
        %v1106 = vsub.f32 1.0, %v1105
        %v1107 = vmul.f32 %v1104, %v1106
        %v1108 = vadd.f32 %v1104, %v1107
        %vm1109 = vweird.f32 %v1103
        %vm1110 = vweird.f32 %v1104
        %vm1111 = vmor %vm1109, %vm1110
        %v1112 = vsel %vm1111, %v1104, %v1108
        %v1113 = vand.u32 2147483647, %v1103
        %vm1114 = vcmp.eq.f32.partialorder %v1113, 8.507059e+37
        %v1115 = vand.u32 %v1103, 2147483648
        %v1116 = vor.u32 1.1754944e-38, %v1115
        %v1117 = vsel %vm1114, %v1116, %v1112
        %v1118 = vmul.f32 %v1093, %v1117
        %v1119 = vmin.f32 %v1118, 1.0
        %v1120 = vmax.f32 %v1119, -1.0
        %v1121 = vadd.f32 %v1120, 1.0
        %v1122 = vmul.f32 %v1079, %v1121
        %v1123 = vld [vmem:[%s12] sm:$0xf]
        %v1124 = vld [vmem:[%s12 + $0x4] sm:$0xf]
        %v1125 = vld [vmem:[%s12 + $0x8] sm:$0xf]
        %v1126 = vld [vmem:[%s12 + $0xc] sm:$0xf]
        %v1127 = vld [vmem:[%s12 + $0x10] sm:$0xf]
        %v1128 = vld [vmem:[%s12 + $0x14] sm:$0xf]
        %v1129 = vld [vmem:[%s12 + $0x18] sm:$0xf]
        %v1130 = vld [vmem:[%s12 + $0x1c] sm:$0xf]
        %v1131 = vpack.c.bf16 %v1122, %v1122
        %v1132 = vld [vmem:[%s13] sm:$0x1]
        %v1134 = vperm.slane %v1132, 0
        %v1144 = vunpack.c.l.b16 %v1123
        %v1145 = vunpack.c.l.b16 %v1124
        %v1146 = vunpack.c.l.b16 %v1125
        %v1147 = vunpack.c.l.b16 %v1126
        %v1148 = vunpack.c.l.b16 %v1127
        %v1149 = vunpack.c.l.b16 %v1128
        %v1150 = vunpack.c.l.b16 %v1129
        %v1151 = vunpack.c.l.b16 %v1130
        %v1152 = vpack.c.b16 %v1145, %v1144
        %v1153 = vpack.c.b16 %v1147, %v1146
        %v1154 = vpack.c.b16 %v1149, %v1148
        %v1155 = vpack.c.b16 %v1151, %v1150
        %vm1160 = vcmask 523264
        %v1162 = vsel %vm1160, %v1131, 0
        %1164 = vmatpush.bf16.msra.mxu0 0
        %1165 = vmatpush.bf16.msra.mxu0 0
        %1166 = vmatpush.bf16.msra.mxu0 0
        %1167 = vmatpush.bf16.msra.mxu0 0
        %1168 = vmatpush.bf16.msra.mxu0 %v1155
        %1169 = vmatpush.bf16.msra.mxu0 %v1154
        %1170 = vmatpush.bf16.msra.mxu0 %v1153
        %1171 = vmatpush.bf16.msra.mxu0 %v1152
        %1172 = vmatmul.bf16.gmra.mxu0 %v1162
        %v1173 = vpop.f32.mrf.mxu0
        %v1174 = vadd.f32 %v1134, %v1173
        %v1175 = vpop.f32.mrf.mxu0
        %1176 = vdwg.mxu0
        %v1177 = vadd.f32 %v1174, %v1041
        %v1178 = vld [vmem:[%s14] sm:$0x1]
        %v1179 = vld [vmem:[%s15] sm:$0x1]
        %v1180 = vsel %vm643, %v1177, 0.0
        %1181 = vadd.xlane.f32.xlu0 %v1180
        %v1182 = vpop.xlane.xlu0 %1181
        %v1183 = vmul.f32 %v1182, %v653
        %v1184 = vsub.f32 %v1177, %v1183
        %v1185 = vmul.f32 %v1184, %v1184
        %v1186 = vsel %vm643, %v1185, 0.0
        %1187 = vadd.xlane.f32.xlu0 %v1186
        %v1188 = vpop.xlane.xlu0 %1187
        %v1189 = vmul.f32 %v1188, %v653
        %v1190 = vadd.f32 %v1189, 1e-12
        %v1191 = vrsqrt.pop %v1190
        %v1192 = vmul.f32 %v1191, %v1190
        %v1193 = vmul.f32 %v1192, %v1191
        %v1194 = vmul.f32 0.5, %v1193
        %v1195 = vsub.f32 1.5, %v1194
        %v1196 = vmul.f32 %v1191, %v1195
        %vm1197 = vweird.f32 %v1190
        %vm1198 = vweird.f32 %v1191
        %vm1199 = vmor %vm1197, %vm1198
        %v1200 = vsel %vm1199, %v1191, %v1196
        %v1201 = vmul.f32 %v1184, %v1200
        %v1203 = vperm.slane %v1178, 0
        %v1205 = vmul.f32 %v1201, %v1203
        %v1207 = vperm.slane %v1179, 0
        %v1209 = vadd.f32 %v1205, %v1207
        %s1210 = scalar_lea.vmem %s4, 16
        %v1211 = vld [vmem:[%s1210] sm:$0xf]
        %v1212 = vld [vmem:[%s1210 + $0x4] sm:$0xf]
        %v1213 = vld [vmem:[%s1210 + $0x8] sm:$0xf]
        %v1214 = vld [vmem:[%s1210 + $0xc] sm:$0xf]
        %v1215 = vpack.c.bf16 %v1209, %v1209
        %s1216 = scalar_lea.vmem %s5, 1
        %v1217 = vld [vmem:[%s1216] sm:$0x1]
        %v1219 = vperm.slane %v1217, 0
        %v1225 = vunpack.c.l.b16 %v1211
        %v1226 = vunpack.c.l.b16 %v1212
        %v1227 = vunpack.c.l.b16 %v1213
        %v1228 = vunpack.c.l.b16 %v1214
        %v1229 = vpack.c.b16 %v1226, %v1225
        %v1230 = vpack.c.b16 %v1228, %v1227
        %v1234 = vsel %vm643, %v1215, 0
        %1236 = vmatpush.bf16.msra.mxu0 0
        %1237 = vmatpush.bf16.msra.mxu0 0
        %1238 = vmatpush.bf16.msra.mxu0 0
        %1239 = vmatpush.bf16.msra.mxu0 0
        %1240 = vmatpush.bf16.msra.mxu0 0
        %1241 = vmatpush.bf16.msra.mxu0 0
        %1242 = vmatpush.bf16.msra.mxu0 %v1230
        %1243 = vmatpush.bf16.msra.mxu0 %v1229
        %1244 = vmatmul.bf16.gmra.mxu0 %v1234
        %v1245 = vpop.f32.mrf.mxu0
        %v1246 = vadd.f32 %v1219, %v1245
        %v1247 = vpop.f32.mrf.mxu0
        %1248 = vdwg.mxu0
        %v1249 = vpack.c.bf16 %v1246, %v1246
        %1251 = vrot.lane.b32.xlu0 %v1249, 96
        %v1252 = vpop.permute.xlu0 %1251
        %v1254 = vsel %vm722, %v1249, 0
        %v1257 = vsel %vm722, %v1252, 0
        %1259 = vmatpush.bf16.xpose.msra.mxu0 0
        %1260 = vmatpush.bf16.xpose.msra.mxu0 0
        %1261 = vmatpush.bf16.xpose.msra.mxu0 0
        %1262 = vmatpush.bf16.xpose.msra.mxu0 0
        %1263 = vmatpush.bf16.xpose.msra.mxu0 0
        %1264 = vmatpush.bf16.xpose.msra.mxu0 0
        %1265 = vmatpush.bf16.xpose.msra.mxu0 0
        %1266 = vmatpush.bf16.xpose.msra.mxu0 %v1257
        %1267 = vmatmul.bf16.gmra.mxu0 %v1254
        %v1268 = vpop.f32.mrf.mxu0
        %v1269 = vadd.f32 0.0, %v1268
        %v1270 = vpop.f32.mrf.mxu0
        %1271 = vdwg.mxu0
        %v1272 = vmul.f32 %v1269, 0.35355338
        %v1273 = vadd.f32 %v1272, %v744
        %v1274 = vsel %vm722, %v1273, -inf
        %1275 = vmax.xlane.f32.xlu0 %v1274
        %v1276 = vpop.xlane.xlu0 %1275
        %v1277 = vsub.f32 %v1273, %v1276
        %v1278 = vmul.f32 %v1277, 1.442695
        %v1279 = vpow.pop %v1278
        %v1280 = vsel %vm722, %v1279, 0.0
        %1281 = vadd.xlane.f32.xlu0 %v1280
        %v1282 = vpop.xlane.xlu0 %1281
        %v1283 = vrcp.pop %v1282
        %v1284 = vmul.f32 %v1279, %v1283
        %v1285 = vpack.c.bf16 %v1284, %v1284
        %1286 = vrot.lane.b32.xlu0 %v1249, 64
        %v1287 = vpop.permute.xlu0 %1286
        %v1289 = vsel %vm722, %v1285, 0
        %v1292 = vsel %vm764, %v1287, 0
        %1294 = vmatpush.bf16.msra.mxu0 0
        %1295 = vmatpush.bf16.msra.mxu0 0
        %1296 = vmatpush.bf16.msra.mxu0 0
        %1297 = vmatpush.bf16.msra.mxu0 0
        %1298 = vmatpush.bf16.msra.mxu0 0
        %1299 = vmatpush.bf16.msra.mxu0 0
        %1300 = vmatpush.bf16.msra.mxu0 0
        %1301 = vmatpush.bf16.msra.mxu0 %v1292
        %1302 = vmatmul.bf16.gmra.mxu0 %v1289
        %v1303 = vpop.f32.mrf.mxu0
        %v1304 = vadd.f32 0.0, %v1303
        %v1305 = vpop.f32.mrf.mxu0
        %1306 = vdwg.mxu0
        %1307 = vrot.lane.b32.xlu0 %v1249, 120
        %v1308 = vpop.permute.xlu0 %1307
        %1309 = vrot.lane.b32.xlu0 %v1249, 88
        %v1310 = vpop.permute.xlu0 %1309
        %v1312 = vsel %vm722, %v1308, 0
        %v1315 = vsel %vm722, %v1310, 0
        %1317 = vmatpush.bf16.xpose.msra.mxu0 0
        %1318 = vmatpush.bf16.xpose.msra.mxu0 0
        %1319 = vmatpush.bf16.xpose.msra.mxu0 0
        %1320 = vmatpush.bf16.xpose.msra.mxu0 0
        %1321 = vmatpush.bf16.xpose.msra.mxu0 0
        %1322 = vmatpush.bf16.xpose.msra.mxu0 0
        %1323 = vmatpush.bf16.xpose.msra.mxu0 0
        %1324 = vmatpush.bf16.xpose.msra.mxu0 %v1315
        %1325 = vmatmul.bf16.gmra.mxu0 %v1312
        %v1326 = vpop.f32.mrf.mxu0
        %v1327 = vadd.f32 0.0, %v1326
        %v1328 = vpop.f32.mrf.mxu0
        %1329 = vdwg.mxu0
        %v1330 = vmul.f32 %v1327, 0.35355338
        %v1331 = vadd.f32 %v1330, %v744
        %v1332 = vsel %vm722, %v1331, -inf
        %1333 = vmax.xlane.f32.xlu0 %v1332
        %v1334 = vpop.xlane.xlu0 %1333
        %v1335 = vsub.f32 %v1331, %v1334
        %v1336 = vmul.f32 %v1335, 1.442695
        %v1337 = vpow.pop %v1336
        %v1338 = vsel %vm722, %v1337, 0.0
        %1339 = vadd.xlane.f32.xlu0 %v1338
        %v1340 = vpop.xlane.xlu0 %1339
        %v1341 = vrcp.pop %v1340
        %v1342 = vmul.f32 %v1337, %v1341
        %v1343 = vpack.c.bf16 %v1342, %v1342
        %1344 = vrot.lane.b32.xlu0 %v1249, 56
        %v1345 = vpop.permute.xlu0 %1344
        %v1347 = vsel %vm722, %v1343, 0
        %v1350 = vsel %vm764, %v1345, 0
        %1352 = vmatpush.bf16.msra.mxu0 0
        %1353 = vmatpush.bf16.msra.mxu0 0
        %1354 = vmatpush.bf16.msra.mxu0 0
        %1355 = vmatpush.bf16.msra.mxu0 0
        %1356 = vmatpush.bf16.msra.mxu0 0
        %1357 = vmatpush.bf16.msra.mxu0 0
        %1358 = vmatpush.bf16.msra.mxu0 0
        %1359 = vmatpush.bf16.msra.mxu0 %v1350
        %1360 = vmatmul.bf16.gmra.mxu0 %v1347
        %v1361 = vpop.f32.mrf.mxu0
        %v1362 = vadd.f32 0.0, %v1361
        %v1363 = vpop.f32.mrf.mxu0
        %1364 = vdwg.mxu0
        %1365 = vrot.lane.b32.xlu0 %v1249, 112
        %v1366 = vpop.permute.xlu0 %1365
        %1367 = vrot.lane.b32.xlu0 %v1249, 80
        %v1368 = vpop.permute.xlu0 %1367
        %v1370 = vsel %vm722, %v1366, 0
        %v1373 = vsel %vm722, %v1368, 0
        %1375 = vmatpush.bf16.xpose.msra.mxu0 0
        %1376 = vmatpush.bf16.xpose.msra.mxu0 0
        %1377 = vmatpush.bf16.xpose.msra.mxu0 0
        %1378 = vmatpush.bf16.xpose.msra.mxu0 0
        %1379 = vmatpush.bf16.xpose.msra.mxu0 0
        %1380 = vmatpush.bf16.xpose.msra.mxu0 0
        %1381 = vmatpush.bf16.xpose.msra.mxu0 0
        %1382 = vmatpush.bf16.xpose.msra.mxu0 %v1373
        %1383 = vmatmul.bf16.gmra.mxu0 %v1370
        %v1384 = vpop.f32.mrf.mxu0
        %v1385 = vadd.f32 0.0, %v1384
        %v1386 = vpop.f32.mrf.mxu0
        %1387 = vdwg.mxu0
        %v1388 = vmul.f32 %v1385, 0.35355338
        %v1389 = vadd.f32 %v1388, %v744
        %v1390 = vsel %vm722, %v1389, -inf
        %1391 = vmax.xlane.f32.xlu0 %v1390
        %v1392 = vpop.xlane.xlu0 %1391
        %v1393 = vsub.f32 %v1389, %v1392
        %v1394 = vmul.f32 %v1393, 1.442695
        %v1395 = vpow.pop %v1394
        %v1396 = vsel %vm722, %v1395, 0.0
        %1397 = vadd.xlane.f32.xlu0 %v1396
        %v1398 = vpop.xlane.xlu0 %1397
        %v1399 = vrcp.pop %v1398
        %v1400 = vmul.f32 %v1395, %v1399
        %v1401 = vpack.c.bf16 %v1400, %v1400
        %1402 = vrot.lane.b32.xlu0 %v1249, 48
        %v1403 = vpop.permute.xlu0 %1402
        %v1405 = vsel %vm722, %v1401, 0
        %v1408 = vsel %vm764, %v1403, 0
        %1410 = vmatpush.bf16.msra.mxu0 0
        %1411 = vmatpush.bf16.msra.mxu0 0
        %1412 = vmatpush.bf16.msra.mxu0 0
        %1413 = vmatpush.bf16.msra.mxu0 0
        %1414 = vmatpush.bf16.msra.mxu0 0
        %1415 = vmatpush.bf16.msra.mxu0 0
        %1416 = vmatpush.bf16.msra.mxu0 0
        %1417 = vmatpush.bf16.msra.mxu0 %v1408
        %1418 = vmatmul.bf16.gmra.mxu0 %v1405
        %v1419 = vpop.f32.mrf.mxu0
        %v1420 = vadd.f32 0.0, %v1419
        %v1421 = vpop.f32.mrf.mxu0
        %1422 = vdwg.mxu0
        %1423 = vrot.lane.b32.xlu0 %v1249, 104
        %v1424 = vpop.permute.xlu0 %1423
        %1425 = vrot.lane.b32.xlu0 %v1249, 72
        %v1426 = vpop.permute.xlu0 %1425
        %v1428 = vsel %vm722, %v1424, 0
        %v1431 = vsel %vm722, %v1426, 0
        %1433 = vmatpush.bf16.xpose.msra.mxu0 0
        %1434 = vmatpush.bf16.xpose.msra.mxu0 0
        %1435 = vmatpush.bf16.xpose.msra.mxu0 0
        %1436 = vmatpush.bf16.xpose.msra.mxu0 0
        %1437 = vmatpush.bf16.xpose.msra.mxu0 0
        %1438 = vmatpush.bf16.xpose.msra.mxu0 0
        %1439 = vmatpush.bf16.xpose.msra.mxu0 0
        %1440 = vmatpush.bf16.xpose.msra.mxu0 %v1431
        %1441 = vmatmul.bf16.gmra.mxu0 %v1428
        %v1442 = vpop.f32.mrf.mxu0
        %v1443 = vadd.f32 0.0, %v1442
        %v1444 = vpop.f32.mrf.mxu0
        %1445 = vdwg.mxu0
        %v1446 = vmul.f32 %v1443, 0.35355338
        %v1447 = vadd.f32 %v1446, %v744
        %v1448 = vsel %vm722, %v1447, -inf
        %1449 = vmax.xlane.f32.xlu0 %v1448
        %v1450 = vpop.xlane.xlu0 %1449
        %v1451 = vsub.f32 %v1447, %v1450
        %v1452 = vmul.f32 %v1451, 1.442695
        %v1453 = vpow.pop %v1452
        %v1454 = vsel %vm722, %v1453, 0.0
        %1455 = vadd.xlane.f32.xlu0 %v1454
        %v1456 = vpop.xlane.xlu0 %1455
        %v1457 = vrcp.pop %v1456
        %v1458 = vmul.f32 %v1453, %v1457
        %v1459 = vpack.c.bf16 %v1458, %v1458
        %1460 = vrot.lane.b32.xlu0 %v1249, 40
        %v1461 = vpop.permute.xlu0 %1460
        %v1463 = vsel %vm722, %v1459, 0
        %v1466 = vsel %vm764, %v1461, 0
        %1468 = vmatpush.bf16.msra.mxu0 0
        %1469 = vmatpush.bf16.msra.mxu0 0
        %1470 = vmatpush.bf16.msra.mxu0 0
        %1471 = vmatpush.bf16.msra.mxu0 0
        %1472 = vmatpush.bf16.msra.mxu0 0
        %1473 = vmatpush.bf16.msra.mxu0 0
        %1474 = vmatpush.bf16.msra.mxu0 0
        %1475 = vmatpush.bf16.msra.mxu0 %v1466
        %1476 = vmatmul.bf16.gmra.mxu0 %v1463
        %v1477 = vpop.f32.mrf.mxu0
        %v1478 = vadd.f32 0.0, %v1477
        %v1479 = vpop.f32.mrf.mxu0
        %1480 = vdwg.mxu0
        %1482 = vrot.lane.b32.xlu0 %v1362, 8
        %v1483 = vpop.permute.xlu0 %1482
        %1486 = vrot.lane.b32.xlu0 %v1420, 16
        %v1487 = vpop.permute.xlu0 %1486
        %1490 = vrot.lane.b32.xlu0 %v1478, 24
        %v1491 = vpop.permute.xlu0 %1490
        %v1493 = vsel %vm722, %v1304, %v1483
        %v1494 = vsel %vm968, %v1493, %v1487
        %v1495 = vsel %vm970, %v1494, %v1491
        %s1496 = scalar_lea.vmem %s6, 16
        %v1497 = vld [vmem:[%s1496] sm:$0xf]
        %v1498 = vld [vmem:[%s1496 + $0x4] sm:$0xf]
        %v1499 = vld [vmem:[%s1496 + $0x8] sm:$0xf]
        %v1500 = vld [vmem:[%s1496 + $0xc] sm:$0xf]
        %v1501 = vpack.c.bf16 %v1495, %v1495
        %s1502 = scalar_lea.vmem %s7, 1
        %v1503 = vld [vmem:[%s1502] sm:$0x1]
        %v1505 = vperm.slane %v1503, 0
        %v1511 = vunpack.c.l.b16 %v1497
        %v1512 = vunpack.c.l.b16 %v1498
        %v1513 = vunpack.c.l.b16 %v1499
        %v1514 = vunpack.c.l.b16 %v1500
        %v1515 = vpack.c.b16 %v1512, %v1511
        %v1516 = vpack.c.b16 %v1514, %v1513
        %v1520 = vsel %vm643, %v1501, 0
        %1522 = vmatpush.bf16.msra.mxu0 0
        %1523 = vmatpush.bf16.msra.mxu0 0
        %1524 = vmatpush.bf16.msra.mxu0 0
        %1525 = vmatpush.bf16.msra.mxu0 0
        %1526 = vmatpush.bf16.msra.mxu0 0
        %1527 = vmatpush.bf16.msra.mxu0 0
        %1528 = vmatpush.bf16.msra.mxu0 %v1516
        %1529 = vmatpush.bf16.msra.mxu0 %v1515
        %1530 = vmatmul.bf16.gmra.mxu0 %v1520
        %v1531 = vpop.f32.mrf.mxu0
        %v1532 = vadd.f32 %v1505, %v1531
        %v1533 = vpop.f32.mrf.mxu0
        %1534 = vdwg.mxu0
        %v1535 = vadd.f32 %v1532, %v1209
        %s1536 = scalar_lea.vmem %s8, 1
        %v1537 = vld [vmem:[%s1536] sm:$0x1]
        %s1538 = scalar_lea.vmem %s9, 1
        %v1539 = vld [vmem:[%s1538] sm:$0x1]
        %v1540 = vsel %vm643, %v1535, 0.0
        %1541 = vadd.xlane.f32.xlu0 %v1540
        %v1542 = vpop.xlane.xlu0 %1541
        %v1543 = vmul.f32 %v1542, %v653
        %v1544 = vsub.f32 %v1535, %v1543
        %v1545 = vmul.f32 %v1544, %v1544
        %v1546 = vsel %vm643, %v1545, 0.0
        %1547 = vadd.xlane.f32.xlu0 %v1546
        %v1548 = vpop.xlane.xlu0 %1547
        %v1549 = vmul.f32 %v1548, %v653
        %v1550 = vadd.f32 %v1549, 1e-12
        %v1551 = vrsqrt.pop %v1550
        %v1552 = vmul.f32 %v1551, %v1550
        %v1553 = vmul.f32 %v1552, %v1551
        %v1554 = vmul.f32 0.5, %v1553
        %v1555 = vsub.f32 1.5, %v1554
        %v1556 = vmul.f32 %v1551, %v1555
        %vm1557 = vweird.f32 %v1550
        %vm1558 = vweird.f32 %v1551
        %vm1559 = vmor %vm1557, %vm1558
        %v1560 = vsel %vm1559, %v1551, %v1556
        %v1561 = vmul.f32 %v1544, %v1560
        %v1563 = vperm.slane %v1537, 0
        %v1565 = vmul.f32 %v1561, %v1563
        %v1567 = vperm.slane %v1539, 0
        %v1569 = vadd.f32 %v1565, %v1567
        %s1570 = scalar_lea.vmem %s10, 16
        %v1571 = vld [vmem:[%s1570] sm:$0xf]
        %v1572 = vld [vmem:[%s1570 + $0x4] sm:$0xf]
        %v1573 = vld [vmem:[%s1570 + $0x8] sm:$0xf]
        %v1574 = vld [vmem:[%s1570 + $0xc] sm:$0xf]
        %v1575 = vpack.c.bf16 %v1569, %v1569
        %s1576 = scalar_lea.vmem %s11, 1
        %v1577 = vld [vmem:[%s1576] sm:$0x1]
        %v1579 = vperm.slane %v1577, 0
        %v1585 = vunpack.c.l.b16 %v1571
        %v1586 = vunpack.c.l.b16 %v1572
        %v1587 = vunpack.c.l.b16 %v1573
        %v1588 = vunpack.c.l.b16 %v1574
        %v1589 = vpack.c.b16 %v1586, %v1585
        %v1590 = vpack.c.b16 %v1588, %v1587
        %v1594 = vsel %vm643, %v1575, 0
        %1596 = vmatpush.bf16.msra.mxu0 0
        %1597 = vmatpush.bf16.msra.mxu0 0
        %1598 = vmatpush.bf16.msra.mxu0 0
        %1599 = vmatpush.bf16.msra.mxu0 0
        %1600 = vmatpush.bf16.msra.mxu0 0
        %1601 = vmatpush.bf16.msra.mxu0 0
        %1602 = vmatpush.bf16.msra.mxu0 %v1590
        %1603 = vmatpush.bf16.msra.mxu0 %v1589
        %1604 = vmatmul.bf16.gmra.mxu0 %v1594
        %v1605 = vpop.f32.mrf.mxu0
        %v1606 = vadd.f32 %v1579, %v1605
        %v1607 = vpop.f32.mrf.mxu0
        %1608 = vdwg.mxu0
        %v1609 = vmul.f32 %v1606, 0.5
        %v1610 = vmul.f32 %v1606, 0.70710677
        %v1611 = vmul.f32 %v1610, %v1610
        %v1612 = vmin.f32 16.0, %v1611
        %v1613 = vmul.f32 %v1612, 2.1237322e-06
        %v1614 = vadd.f32 %v1613, 0.00028619796
        %v1615 = vmul.f32 %v1612, %v1614
        %v1616 = vadd.f32 %v1615, 0.0036580483
        %v1617 = vmul.f32 %v1612, %v1616
        %v1618 = vadd.f32 %v1617, 0.05243302
        %v1619 = vmul.f32 %v1612, %v1618
        %v1620 = vadd.f32 %v1619, 0.18741608
        %v1621 = vmul.f32 %v1612, %v1620
        %v1622 = vadd.f32 %v1621, 1.1283791
        %v1623 = vmul.f32 %v1610, %v1622
        %v1624 = vmul.f32 %v1612, 3.8918573e-05
        %v1625 = vadd.f32 %v1624, 0.001143296
        %v1626 = vmul.f32 %v1612, %v1625
        %v1627 = vadd.f32 %v1626, 0.014752088
        %v1628 = vmul.f32 %v1612, %v1627
        %v1629 = vadd.f32 %v1628, 0.112945676
        %v1630 = vmul.f32 %v1612, %v1629
        %v1631 = vadd.f32 %v1630, 0.4994258
        %v1632 = vmul.f32 %v1612, %v1631
        %v1633 = vadd.f32 %v1632, 1.0
        %v1634 = vrcp.pop %v1633
        %v1635 = vmul.f32 %v1633, %v1634
        %v1636 = vsub.f32 1.0, %v1635
        %v1637 = vmul.f32 %v1634, %v1636
        %v1638 = vadd.f32 %v1634, %v1637
        %vm1639 = vweird.f32 %v1633
        %vm1640 = vweird.f32 %v1634
        %vm1641 = vmor %vm1639, %vm1640
        %v1642 = vsel %vm1641, %v1634, %v1638
        %v1643 = vand.u32 2147483647, %v1633
        %vm1644 = vcmp.eq.f32.partialorder %v1643, 8.507059e+37
        %v1645 = vand.u32 %v1633, 2147483648
        %v1646 = vor.u32 1.1754944e-38, %v1645
        %v1647 = vsel %vm1644, %v1646, %v1642
        %v1648 = vmul.f32 %v1623, %v1647
        %v1649 = vmin.f32 %v1648, 1.0
        %v1650 = vmax.f32 %v1649, -1.0
        %v1651 = vadd.f32 %v1650, 1.0
        %v1652 = vmul.f32 %v1609, %v1651
        %s1653 = scalar_lea.vmem %s12, 32
        %v1654 = vld [vmem:[%s1653] sm:$0xf]
        %v1655 = vld [vmem:[%s1653 + $0x4] sm:$0xf]
        %v1656 = vld [vmem:[%s1653 + $0x8] sm:$0xf]
        %v1657 = vld [vmem:[%s1653 + $0xc] sm:$0xf]
        %v1658 = vld [vmem:[%s1653 + $0x10] sm:$0xf]
        %v1659 = vld [vmem:[%s1653 + $0x14] sm:$0xf]
        %v1660 = vld [vmem:[%s1653 + $0x18] sm:$0xf]
        %v1661 = vld [vmem:[%s1653 + $0x1c] sm:$0xf]
        %v1662 = vpack.c.bf16 %v1652, %v1652
        %s1663 = scalar_lea.vmem %s13, 1
        %v1664 = vld [vmem:[%s1663] sm:$0x1]
        %v1666 = vperm.slane %v1664, 0
        %v1676 = vunpack.c.l.b16 %v1654
        %v1677 = vunpack.c.l.b16 %v1655
        %v1678 = vunpack.c.l.b16 %v1656
        %v1679 = vunpack.c.l.b16 %v1657
        %v1680 = vunpack.c.l.b16 %v1658
        %v1681 = vunpack.c.l.b16 %v1659
        %v1682 = vunpack.c.l.b16 %v1660
        %v1683 = vunpack.c.l.b16 %v1661
        %v1684 = vpack.c.b16 %v1677, %v1676
        %v1685 = vpack.c.b16 %v1679, %v1678
        %v1686 = vpack.c.b16 %v1681, %v1680
        %v1687 = vpack.c.b16 %v1683, %v1682
        %v1693 = vsel %vm1160, %v1662, 0
        %1695 = vmatpush.bf16.msra.mxu0 0
        %1696 = vmatpush.bf16.msra.mxu0 0
        %1697 = vmatpush.bf16.msra.mxu0 0
        %1698 = vmatpush.bf16.msra.mxu0 0
        %1699 = vmatpush.bf16.msra.mxu0 %v1687
        %1700 = vmatpush.bf16.msra.mxu0 %v1686
        %1701 = vmatpush.bf16.msra.mxu0 %v1685
        %1702 = vmatpush.bf16.msra.mxu0 %v1684
        %1703 = vmatmul.bf16.gmra.mxu0 %v1693
        %v1704 = vpop.f32.mrf.mxu0
        %v1705 = vadd.f32 %v1666, %v1704
        %v1706 = vpop.f32.mrf.mxu0
        %1707 = vdwg.mxu0
        %v1708 = vadd.f32 %v1705, %v1569
        %s1709 = scalar_lea.vmem %s14, 1
        %v1710 = vld [vmem:[%s1709] sm:$0x1]
        %s1711 = scalar_lea.vmem %s15, 1
        %v1712 = vld [vmem:[%s1711] sm:$0x1]
        %v1713 = vsel %vm643, %v1708, 0.0
        %1714 = vadd.xlane.f32.xlu0 %v1713
        %v1715 = vpop.xlane.xlu0 %1714
        %v1716 = vmul.f32 %v1715, %v653
        %v1717 = vsub.f32 %v1708, %v1716
        %v1718 = vmul.f32 %v1717, %v1717
        %v1719 = vsel %vm643, %v1718, 0.0
        %1720 = vadd.xlane.f32.xlu0 %v1719
        %v1721 = vpop.xlane.xlu0 %1720
        %v1722 = vmul.f32 %v1721, %v653
        %v1723 = vadd.f32 %v1722, 1e-12
        %v1724 = vrsqrt.pop %v1723
        %v1725 = vmul.f32 %v1724, %v1723
        %v1726 = vmul.f32 %v1725, %v1724
        %v1727 = vmul.f32 0.5, %v1726
        %v1728 = vsub.f32 1.5, %v1727
        %v1729 = vmul.f32 %v1724, %v1728
        %vm1730 = vweird.f32 %v1723
        %vm1731 = vweird.f32 %v1724
        %vm1732 = vmor %vm1730, %vm1731
        %v1733 = vsel %vm1732, %v1724, %v1729
        %v1734 = vmul.f32 %v1717, %v1733
        %v1736 = vperm.slane %v1710, 0
        %v1738 = vmul.f32 %v1734, %v1736
        %v1740 = vperm.slane %v1712, 0
        %v1742 = vadd.f32 %v1738, %v1740
        %v1743 = vld [vmem:[%s16] sm:$0xf]
        %v1744 = vld [vmem:[%s16 + $0x4] sm:$0xf]
        %v1745 = vld [vmem:[%s16 + $0x8] sm:$0xf]
        %v1746 = vld [vmem:[%s16 + $0xc] sm:$0xf]
        %v1747 = vpack.c.bf16 %v1742, %v1742
        %v1748 = vld [vmem:[%s17] sm:$0x1]
        %v1753 = vunpack.c.l.b16 %v1743
        %v1754 = vunpack.c.l.b16 %v1744
        %v1755 = vunpack.c.l.b16 %v1745
        %v1756 = vunpack.c.l.b16 %v1746
        %v1757 = vpack.c.b16 %v1754, %v1753
        %v1758 = vpack.c.b16 %v1756, %v1755
        %v1762 = vsel %vm643, %v1747, 0
        %1764 = vmatpush.bf16.msra.mxu0 0
        %1765 = vmatpush.bf16.msra.mxu0 0
        %1766 = vmatpush.bf16.msra.mxu0 0
        %1767 = vmatpush.bf16.msra.mxu0 0
        %1768 = vmatpush.bf16.msra.mxu0 0
        %1769 = vmatpush.bf16.msra.mxu0 0
        %1770 = vmatpush.bf16.msra.mxu0 %v1758
        %1771 = vmatpush.bf16.msra.mxu0 %v1757
        %1772 = vmatmul.bf16.gmra.mxu0 %v1762
        %v1773 = vpop.f32.mrf.mxu0
        %v1774 = vadd.f32 %v1748, %v1773
        %v1775 = vpop.f32.mrf.mxu0
        %1776 = vdwg.mxu0
        %v1777 = vtanh.pop %v1774
        %v1778 = vld [vmem:[%s18] sm:$0xf]
        %v1779 = vld [vmem:[%s18 + $0x4] sm:$0xf]
        %v1780 = vld [vmem:[%s18 + $0x8] sm:$0xf]
        %v1781 = vld [vmem:[%s18 + $0xc] sm:$0xf]
        %v1782 = vpack.c.bf16 %v1777, %v1777
        %v1783 = vld [vmem:[%s19] sm:$0x1]
        %v1788 = vunpack.c.l.b16 %v1778
        %v1789 = vunpack.c.l.b16 %v1779
        %v1790 = vunpack.c.l.b16 %v1780
        %v1791 = vunpack.c.l.b16 %v1781
        %v1792 = vpack.c.b16 %v1789, %v1788
        %v1793 = vpack.c.b16 %v1791, %v1790
        %v1797 = vsel %vm643, %v1782, 0
        %1799 = vmatpush.bf16.msra.mxu0 0
        %1800 = vmatpush.bf16.msra.mxu0 0
        %1801 = vmatpush.bf16.msra.mxu0 0
        %1802 = vmatpush.bf16.msra.mxu0 0
        %1803 = vmatpush.bf16.msra.mxu0 0
        %1804 = vmatpush.bf16.msra.mxu0 0
        %1805 = vmatpush.bf16.msra.mxu0 %v1793
        %1806 = vmatpush.bf16.msra.mxu0 %v1792
        %1807 = vmatmul.bf16.gmra.mxu0 %v1797
        %v1808 = vpop.f32.mrf.mxu0
        %v1809 = vadd.f32 %v1783, %v1808
        %v1810 = vpop.f32.mrf.mxu0
        %1811 = vdwg.mxu0
        %vm1812 = vcmask 16384
        %1813 = vst.msk [vmem:[%s630] sm:$0x1] %vm1812, %v1809
        %s1814 = sand.u32 %s472, 1
        %s1815 = scalar_lea.sflag [#allocation3], %s1814
        %s1816 = sand.u32 %s472, 1
        %s1817 = scalar_lea.vmem [#allocation2], %s1816
        // Predicated region
        $region101: #{sentiment_classifier_forward.1} parent=99 // pred_check
          %p1818 = pneg %p482
        $region102: #{sentiment_classifier_forward.1} parent=99 // pred_check_branch
          %1820 = sbr.rel (%p1818) target = $region104
        $region103: #{sentiment_classifier_forward.1} parent=99 // pred_region
          %1822 = vsyncadd %s1815, 0
          %s1823 = scalar_lea.hbm %s20, %s34
          %s1825 = sshll.u32 %s1817, 4
          %s1826 = int_to_ptr.vmem [resolvable:$true] %s1825
          %s1827 = sshll.u32 %s1823, 4
          %s1828 = int_to_ptr.hbm [resolvable:$true] %s1827
          %1830 = dma.vmem_to_hbm [thread:$0]  %s1826, 16, %s1828, %s1815
        $region104: #{sentiment_classifier_forward.1} parent=99 // pred_fallthru
          _
      $region100: #{sentiment_classifier_forward.1} parent=5 // pred_fallthru
        _
      %p1831 = scmp.le.s32.totalorder 2, %s29
      // Predicated region
      $region105: #{sentiment_classifier_forward.1} parent=5 // pred_check
        %p1832 = pneg %p1831
      $region106: #{sentiment_classifier_forward.1} parent=5 // pred_check_branch
        %1834 = sbr.rel (%p1832) target = $region108
      $region107: #{sentiment_classifier_forward.1} parent=5 // pred_region
        %s1835 = ssub.s32 %s29, 2
        // Predicated region
        $region109: #{sentiment_classifier_forward.1} parent=107 // pred_check
          %p1836 = pneg %p488
        $region110: #{sentiment_classifier_forward.1} parent=107 // pred_check_branch
          %1838 = sbr.rel (%p1836) target = $region112
        $region111: #{sentiment_classifier_forward.1} parent=107 // pred_region
          %s1839 = sand.u32 %s473, 1
          %s1840 = scalar_lea.sflag [#allocation3], %s1839
          %s1841 = sand.u32 %s473, 1
          %s1842 = scalar_lea.vmem [#allocation2], %s1841
          %1844 = dma.done %s1840, 16
        $region112: #{sentiment_classifier_forward.1} parent=107 // pred_fallthru
          _
      $region108: #{sentiment_classifier_forward.1} parent=5 // pred_fallthru
        _
    $region6: #{sentiment_classifier_forward.1} parent=1 // loop_footer
      %s33 = sadd.s32 1, %s29
    $region7: #{sentiment_classifier_forward.1} parent=1 // loop_footer_branch
      %28 = sbr.rel target = $region3
    $region8: #{sentiment_classifier_forward.1} parent=1 // loop_exit
      _
    %1845 = vsyncpa [#allocation3], 1
    %s1846 = scalar_lea.sflag [#allocation3], 1
    %1847 = vsyncpa %s1846, 1

</llo_original>
